<compile_context>
chip_gen: v7x
topology: tpu7x:2x2x1
jax: 0.10.0
libtpu: 0.0.40
codegen_flags: <defaults>
</compile_context>

<pallas_src>
import functools

import jax
import jax.numpy as jnp
from jax.experimental import pallas as pl
from jax.experimental.pallas import tpu as pltpu

# ----------------------------- model dimensions -----------------------------
COORD_DIM = 128          # cfg.VIT.EMBED_DIM (small synthetic value)
HALF_DIM = COORD_DIM // 2
NR_BOXES = 4             # cfg.DATA.NUM_BOXES
NR_FRAMES = 8            # cfg.DATA.NUM_FRAMES
NR_ACTIONS = 174         # cfg.MODEL.NUM_CLASSES
ACTIONS_PAD = 256        # lane-dense (multiple of 128) classifier output
CLS_HIDDEN = 512         # literal 512 inside self.classifier
NUM_CATS = 3             # nn.Embedding(3, ...)
CATS_PAD = 16            # one-hot width padded to a full bf16 (16,128) tile
BN_EPS = 1e-5            # nn.BatchNorm1d default eps

# ---------------- packed-slab row offsets (bf16 tile = (16,128)) ------------
_D = COORD_DIM
OFF_WA2 = 0
OFF_WB1 = OFF_WA2 + _D                 # 128
OFF_EMB = OFF_WB1 + _D                 # 256   (emb_tab @ wb2, 16 rows)
OFF_WC1 = OFF_EMB + CATS_PAD           # 272
OFF_WC2 = OFF_WC1 + _D                 # 400
OFF_WC3 = OFF_WC2 + _D                 # 528
OFF_WD1 = OFF_WC3 + _D                 # 656   (T*D rows)
OFF_WD2 = OFF_WD1 + NR_FRAMES * _D     # 1680
OFF_WE1 = OFF_WD2 + _D                 # 1808
W128_ROWS = OFF_WE1 + _D               # 1936

OFF_WE2 = 0
OFF_WE3 = OFF_WE2 + _D                 # 128
WCLS_ROWS = OFF_WE3 + CLS_HIDDEN       # 640

FSLAB_ROWS = 8                         # rows 0-3: biases, rows 4-7: wa1 (f32)
FSLAB_COLS = CLS_HIDDEN                # 512


# --------------------------------- kernel -----------------------------------
def _stin_kernel(box_ref, onehot_ref, w_ref, wcls_ref, f_ref, out_ref,
                 *, tb, nr_boxes, nr_frames):
    """Fused STIN forward for one batch tile (eval-mode, BN pre-folded)."""
    f32, bf16 = jnp.float32, jnp.bfloat16
    d = COORD_DIM
    n_tok = tb * nr_boxes * nr_frames

    def mm(x, w):                       # bf16 MXU operands, f32 accumulation
        return jnp.dot(x.astype(bf16), w, preferred_element_type=f32)

    def relu(x):
        return jnp.maximum(x, 0.0)

    # ---- static, tile-aligned slices into the packed parameter slabs -------
    ba1 = f_ref[0:1, 0 * d:1 * d]
    ba2 = f_ref[0:1, 1 * d:2 * d]
    bb = f_ref[0:1, 2 * d:3 * d]
    bc1 = f_ref[0:1, 3 * d:4 * d]
    bc2 = f_ref[1:2, 0 * d:1 * d]
    bd1 = f_ref[1:2, 1 * d:2 * d]
    bd2 = f_ref[1:2, 2 * d:3 * d]
    be1 = f_ref[1:2, 3 * d:4 * d]
    be2 = f_ref[2:3, :]                                   # (1, 512)
    be3 = f_ref[3:4, 0:ACTIONS_PAD]                       # (1, 256)
    wa1 = f_ref[4:8, 0:d]                                 # (4, 128) f32

    wa2 = w_ref[OFF_WA2:OFF_WA2 + d, :]
    wb1 = w_ref[OFF_WB1:OFF_WB1 + d, :]
    ewb2 = w_ref[OFF_EMB:OFF_EMB + CATS_PAD, :]           # emb_tab @ wb2
    wc1 = w_ref[OFF_WC1:OFF_WC1 + d, :]
    wc2 = w_ref[OFF_WC2:OFF_WC2 + d, :]
    wc3 = w_ref[OFF_WC3:OFF_WC3 + d, :]
    wd1 = w_ref[OFF_WD1:OFF_WD1 + nr_frames * d, :]       # (T*D, D)
    wd2 = w_ref[OFF_WD2:OFF_WD2 + d, :]
    we1 = w_ref[OFF_WE1:OFF_WE1 + d, :]
    we2 = wcls_ref[OFF_WE2:OFF_WE2 + d, :]                # (D, 512)
    we3 = wcls_ref[OFF_WE3:OFF_WE3 + CLS_HIDDEN, 0:ACTIONS_PAD]

    # ---- coord_to_feature layer 1 on the VPU in f32 (K=4, exact coords) ----
    boxes = box_ref[...]                                  # (N, 4) f32
    h = ba1 + boxes[:, 0:1] * wa1[0:1, :]
    for k in range(1, 4):
        h = h + boxes[:, k:k + 1] * wa1[k:k + 1, :]
    h = relu(h)                                           # (N, D) lane-dense
    bf_feat = relu(mm(h, wa2) + ba2)                      # (N, D)

    # ---- category embedding folded through the fusion weight + pre-split
    #      concat-Linear (coord_category_fusion) -----------------------------
    bf_fused = relu(mm(bf_feat, wb1) + mm(onehot_ref[...], ewb2) + bb)

    # ---- spatial message passing over boxes --------------------------------
    bf4 = bf_fused.reshape(tb, nr_boxes, nr_frames, d)
    msg4 = (jnp.sum(bf4, axis=1, keepdims=True) - bf4) * (1.0 / (nr_boxes - 1))
    msg = msg4.reshape(n_tok, d)

    # ---- spatial_node_fusion (concat pre-split into two matmuls) -----------
    h = relu(mm(bf_fused, wc1) + mm(msg, wc2) + bc1)
    bf_sp = relu(mm(h, wc3) + bc2)                        # (N, D)

    # ---- box_feature_fusion: ONE K = T*D contraction ------------------------
    # Lay the T frames of each box out along lanes (128-aligned lane concat is
    # a vreg relabel) so Linear(T*D -> D) is a single K=1024 MXU push instead
    # of T small matmuls and a serial add chain.
    x3 = bf_sp.reshape(tb * nr_boxes, nr_frames, d)
    x_wide = jnp.concatenate([x3[:, t, :] for t in range(nr_frames)], axis=-1)
    h = relu(mm(x_wide, wd1) + bd1)
    box_feats = relu(mm(h, wd2) + bd2)                    # (tb*nr_boxes, D)

    # ---- mean over boxes ----------------------------------------------------
    video = jnp.sum(box_feats.reshape(tb, nr_boxes, d), axis=1) * (1.0 / nr_boxes)

    # ---- classifier (output zero-padded to a lane-dense 256 columns) -------
    h = relu(mm(video, we1) + be1)
    h = relu(mm(h, we2) + be2)
    out_ref[...] = mm(h, we3) + be3                       # (tb, ACTIONS_PAD)


# --------------------------------- wrapper ----------------------------------
@functools.partial(
    jax.jit, static_argnames=("b", "nr_boxes", "nr_frames", "samples_per_tile"))
def stin_forward(object_boxes, box_category, packed, *, b, nr_boxes, nr_frames,
                 samples_per_tile=64):
    """object_boxes: (b, T, nr_boxes, 4) float, box_category: (b, T, nr_boxes) int."""
    w128, wcls, fslab = packed
    tb = min(b, samples_per_tile)              # samples per grid step
    n_tiles = pl.cdiv(b, tb)
    b_pad = n_tiles * tb
    n_tok = b * nr_boxes * nr_frames
    n_tok_pad = b_pad * nr_boxes * nr_frames
    tile_tok = tb * nr_boxes * nr_frames       # tokens per grid step

    # layout plumbing == torch .transpose(2, 1).contiguous().view(...)
    boxes = jnp.transpose(object_boxes, (0, 2, 1, 3)).reshape(n_tok, 4)
    boxes = boxes.astype(jnp.float32)          # coords stay f32 (precision note)
    cats = jnp.transpose(box_category, (0, 2, 1)).reshape(n_tok)
    onehot = jax.nn.one_hot(cats, CATS_PAD, dtype=jnp.bfloat16)
    if n_tok_pad != n_tok:                     # pad batch up to whole tiles
        boxes = jnp.pad(boxes, ((0, n_tok_pad - n_tok), (0, 0)))
        onehot = jnp.pad(onehot, ((0, n_tok_pad - n_tok), (0, 0)))

    out = pl.pallas_call(
        functools.partial(_stin_kernel, tb=tb, nr_boxes=nr_boxes,
                          nr_frames=nr_frames),
        out_shape=jax.ShapeDtypeStruct((b_pad, ACTIONS_PAD), jnp.float32),
        grid=(n_tiles,),
        in_specs=[
            pl.BlockSpec((tile_tok, 4), lambda i: (i, 0)),
            pl.BlockSpec((tile_tok, CATS_PAD), lambda i: (i, 0)),
            # parameter slabs: constant block index -> resident across the grid
            pl.BlockSpec((W128_ROWS, COORD_DIM), lambda i: (0, 0)),
            pl.BlockSpec((WCLS_ROWS, CLS_HIDDEN), lambda i: (0, 0)),
            pl.BlockSpec((FSLAB_ROWS, FSLAB_COLS), lambda i: (0, 0)),
        ],
        out_specs=pl.BlockSpec((tb, ACTIONS_PAD), lambda i: (i, 0)),
        compiler_params=pltpu.CompilerParams(
            dimension_semantics=("parallel",)),  # megacore batch sharding (v7x)
    )(boxes, onehot, w128, wcls, fslab)
    return out[:b, :NR_ACTIONS]


# --------------------------- parameter construction -------------------------
def init_raw_params(key):
    """Torch-layout synthetic parameters: Linear weights are (out, in),
    BatchNorm layers carry (gamma, beta, running mean/var)."""
    d, d2, t = COORD_DIM, HALF_DIM, NR_FRAMES
    ks = iter(jax.random.split(key, 24))
    s = 0.05

    def w(shape):
        return (s * jax.random.normal(next(ks), shape)).astype(jnp.float32)

    def bn(dim):
        k1, k2, k3, k4 = jax.random.split(next(ks), 4)
        return {"gamma": 1.0 + 0.2 * jax.random.normal(k1, (dim,)),
                "beta": 0.1 * jax.random.normal(k2, (dim,)),
                "mean": 0.05 * jax.random.normal(k3, (dim,)),
                "var": jax.random.uniform(k4, (dim,), minval=0.5, maxval=1.5)}

    embed = w((NUM_CATS, d2)).at[0].set(0.0)        # padding_idx=0 row is zeros
    return {
        "embed": embed,
        "a1_w": w((d2, 4)),          "a1_bn": bn(d2),
        "a2_w": w((d, d2)),          "a2_bn": bn(d),
        "b_w":  w((d, d + d2)),      "b_bn":  bn(d),
        "c1_w": w((d, 2 * d)),       "c1_bn": bn(d),
        "c2_w": w((d, d)),           "c2_bn": bn(d),
        "d1_w": w((d, t * d)),       "d1_bn": bn(d),
        "d2_w": w((d, d)),           "d2_bn": bn(d),
        "e1_w": w((d, d)),           "e1_b": w((d,)),
        "e2_w": w((CLS_HIDDEN, d)),  "e2_b": w((CLS_HIDDEN,)),
        "e3_w": w((NR_ACTIONS, CLS_HIDDEN)), "e3_b": w((NR_ACTIONS,)),
    }


def fold_params(raw):
    """One-time, input-independent parameter preparation:
      * fold eval-mode BatchNorm into each preceding bias-free Linear,
      * pre-transpose every weight to (in, out),
      * pre-split the two concat-then-Linear weights,
      * fold the category-embedding table through the fusion weight (emb@wb2),
      * zero-pad the 64-wide coord hidden to 128 lanes and the classifier
        output to a lane-dense 256 columns,
      * pack everything into 3 slabs (2x bf16 weights, 1x f32 biases + the
        small f32 first-layer weight) so the kernel takes 5 input DMAs."""
    d, d2, t = COORD_DIM, HALF_DIM, NR_FRAMES

    def fold(wt, bnp):                               # wt: torch (out, in)
        scale = bnp["gamma"] * jax.lax.rsqrt(bnp["var"] + BN_EPS)
        w_f = (wt * scale[:, None]).T.astype(jnp.float32)       # (in, out)
        b_f = (bnp["beta"] - bnp["mean"] * scale).astype(jnp.float32)
        return w_f, b_f

    wa1_f, ba1 = fold(raw["a1_w"], raw["a1_bn"])     # (4, 64)
    wa2_f, ba2 = fold(raw["a2_w"], raw["a2_bn"])     # (64, 128)
    wb_f, bb = fold(raw["b_w"], raw["b_bn"])         # (192, 128)
    wb1_f, wb2_f = wb_f[:d], wb_f[d:]
    wc_f, bc1 = fold(raw["c1_w"], raw["c1_bn"])      # (256, 128)
    wc1_f, wc2_f = wc_f[:d], wc_f[d:]
    wc3_f, bc2 = fold(raw["c2_w"], raw["c2_bn"])
    wd_f, bd1 = fold(raw["d1_w"], raw["d1_bn"])      # (T*D, 128)
    wd2_f, bd2 = fold(raw["d2_w"], raw["d2_bn"])

    # category embedding folded through the (pre-split) fusion weight
    emb_pad = jnp.zeros((CATS_PAD, d2), jnp.float32).at[:NUM_CATS].set(raw["embed"])
    emb_wb2 = emb_pad @ wb2_f                        # (16, 128)

    # zero-pad the 64-wide hidden of coord_to_feature to a lane-dense 128
    wa1_p = jnp.zeros((4, d), jnp.float32).at[:, :d2].set(wa1_f)
    ba1_p = jnp.zeros((d,), jnp.float32).at[:d2].set(ba1)
    wa2_p = jnp.zeros((d, d), jnp.float32).at[:d2, :].set(wa2_f)

    # bf16 weight slab (width 128, row offsets aligned to bf16 (16,128) tiles)
    w128 = jnp.zeros((W128_ROWS, d), jnp.float32)
    w128 = w128.at[OFF_WA2:OFF_WA2 + d].set(wa2_p)
    w128 = w128.at[OFF_WB1:OFF_WB1 + d].set(wb1_f)
    w128 = w128.at[OFF_EMB:OFF_EMB + CATS_PAD].set(emb_wb2)
    w128 = w128.at[OFF_WC1:OFF_WC1 + d].set(wc1_f)
    w128 = w128.at[OFF_WC2:OFF_WC2 + d].set(wc2_f)
    w128 = w128.at[OFF_WC3:OFF_WC3 + d].set(wc3_f)
    w128 = w128.at[OFF_WD1:OFF_WD1 + t * d].set(wd_f)
    w128 = w128.at[OFF_WD2:OFF_WD2 + d].set(wd2_f)
    w128 = w128.at[OFF_WE1:OFF_WE1 + d].set(raw["e1_w"].T)
    w128 = w128.astype(jnp.bfloat16)

    # bf16 classifier slab (width 512); classifier output padded to 256 lanes
    wcls = jnp.zeros((WCLS_ROWS, CLS_HIDDEN), jnp.float32)
    wcls = wcls.at[OFF_WE2:OFF_WE2 + d].set(raw["e2_w"].T)
    wcls = wcls.at[OFF_WE3:OFF_WE3 + CLS_HIDDEN, :NR_ACTIONS].set(raw["e3_w"].T)
    wcls = wcls.astype(jnp.bfloat16)

    # f32 slab: eight folded 128-wide biases (rows 0-1), classifier biases
    # (rows 2-3), and the f32 first-layer weight (rows 4-7)
    fslab = jnp.zeros((FSLAB_ROWS, FSLAB_COLS), jnp.float32)
    fslab = fslab.at[0, 0 * d:1 * d].set(ba1_p)
    fslab = fslab.at[0, 1 * d:2 * d].set(ba2)
    fslab = fslab.at[0, 2 * d:3 * d].set(bb)
    fslab = fslab.at[0, 3 * d:4 * d].set(bc1)
    fslab = fslab.at[1, 0 * d:1 * d].set(bc2)
    fslab = fslab.at[1, 1 * d:2 * d].set(bd1)
    fslab = fslab.at[1, 2 * d:3 * d].set(bd2)
    fslab = fslab.at[1, 3 * d:4 * d].set(raw["e1_b"])
    fslab = fslab.at[2, :].set(raw["e2_b"])
    fslab = fslab.at[3, :NR_ACTIONS].set(raw["e3_b"])
    fslab = fslab.at[4:8, :d].set(wa1_p)

    return (w128, wcls, fslab)


# ------------------------- pure-JAX f32 reference ---------------------------
def stin_reference(object_boxes, box_category, raw, *, b, nr_boxes, nr_frames):
    """Faithful f32 replica of the PyTorch forward (classifier branch)."""
    d = COORD_DIM
    n_tok = b * nr_boxes * nr_frames

    def bn(x, p):
        return (x - p["mean"]) / jnp.sqrt(p["var"] + BN_EPS) * p["gamma"] + p["beta"]

    def lin(x, w, bias=None):
        y = x @ w.T
        return y if bias is None else y + bias

    boxes = jnp.transpose(object_boxes, (0, 2, 1, 3)).reshape(n_tok, 4)
    cats = jnp.transpose(box_category, (0, 2, 1)).reshape(n_tok)

    emb = raw["embed"][cats]                                        # (N, D/2)
    h = jax.nn.relu(bn(lin(boxes, raw["a1_w"]), raw["a1_bn"]))
    bf = jax.nn.relu(bn(lin(h, raw["a2_w"]), raw["a2_bn"]))
    bf = jnp.concatenate([bf, emb], axis=1)
    bf = jax.nn.relu(bn(lin(bf, raw["b_w"]), raw["b_bn"]))
    bf4 = bf.reshape(b, nr_boxes, nr_frames, d)
    msg = (bf4.sum(axis=1, keepdims=True) - bf4) / (nr_boxes - 1)
    cat_in = jnp.concatenate([bf4, msg], axis=3).reshape(n_tok, 2 * d)
    h = jax.nn.relu(bn(lin(cat_in, raw["c1_w"]), raw["c1_bn"]))
    bf_sp = jax.nn.relu(bn(lin(h, raw["c2_w"]), raw["c2_bn"]))
    tmp = bf_sp.reshape(b * nr_boxes, nr_frames * d)
    h = jax.nn.relu(bn(lin(tmp, raw["d1_w"]), raw["d1_bn"]))
    box_feats = jax.nn.relu(bn(lin(h, raw["d2_w"]), raw["d2_bn"]))
    video = box_feats.reshape(b, nr_boxes, d).mean(axis=1)
    h = jax.nn.relu(lin(video, raw["e1_w"], raw["e1_b"]))
    h = jax.nn.relu(lin(h, raw["e2_w"], raw["e2_b"]))
    return lin(h, raw["e3_w"], raw["e3_b"])


# ----------------------------------- main -----------------------------------
if __name__ == "__main__":
    B = 2
    key = jax.random.PRNGKey(0)
    kb, kc, kp = jax.random.split(key, 3)

    object_boxes = jax.random.uniform(kb, (B, NR_FRAMES, NR_BOXES, 4),
                                      dtype=jnp.float32)
    box_category = jax.random.randint(kc, (B, NR_FRAMES, NR_BOXES), 0, NUM_CATS)

    raw = init_raw_params(kp)
    kparams = fold_params(raw)

    out = stin_forward(object_boxes, box_category, kparams,
                       b=B, nr_boxes=NR_BOXES, nr_frames=NR_FRAMES)
    out = jax.block_until_ready(out)

    ref = stin_reference(object_boxes, box_category, raw,
                         b=B, nr_boxes=NR_BOXES, nr_frames=NR_FRAMES)
    assert out.shape == (B, NR_ACTIONS), out.shape
    # bf16 MXU operands vs f32 reference -> loose tolerance
    assert jnp.allclose(out, ref, atol=2e-2, rtol=2e-2), \
        float(jnp.max(jnp.abs(out - ref)))

    print("KERNEL_OK")
</pallas_src>

<mosaic_0001>
module attributes {stable_mosaic.version = 11 : i64} {
  func.func @_stin_kernel(%arg0: i32, %arg1: memref<64x4xf32, #tpu.memory_space<vmem>>, %arg2: memref<64x16xbf16, #tpu.memory_space<vmem>>, %arg3: memref<1936x128xbf16, #tpu.memory_space<vmem>>, %arg4: memref<640x512xbf16, #tpu.memory_space<vmem>>, %arg5: memref<8x512xf32, #tpu.memory_space<vmem>>, %arg6: memref<2x256xf32, #tpu.memory_space<vmem>>) attributes {dimension_semantics = [#tpu.dimension_semantics<parallel>], iteration_bounds = array<i64: 1>, scalar_prefetch = 0 : i64, scratch_operands = 0 : i64, tpu.core_type = #tpu.core_type<tc>, window_params = [{transform_indices = @transform_0, window_bounds = array<i64: 64, 4>}, {transform_indices = @transform_1, window_bounds = array<i64: 64, 16>}, {pipeline_mode = #tpu.pipeline_mode<synchronous>, transform_indices = @transform_2, window_bounds = array<i64: 1936, 128>}, {pipeline_mode = #tpu.pipeline_mode<synchronous>, transform_indices = @transform_3, window_bounds = array<i64: 640, 512>}, {pipeline_mode = #tpu.pipeline_mode<synchronous>, transform_indices = @transform_4, window_bounds = array<i64: 8, 512>}, {transform_indices = @transform_5, window_bounds = array<i64: 2, 256>}]} {
    %c0 = arith.constant 0 : index
    %c0_0 = arith.constant 0 : index
    %0 = vector.load %arg5[%c0, %c0_0] : memref<8x512xf32, #tpu.memory_space<vmem>>, vector<1x128xf32>
    %c0_1 = arith.constant 0 : index
    %c128 = arith.constant 128 : index
    %1 = vector.load %arg5[%c0_1, %c128] : memref<8x512xf32, #tpu.memory_space<vmem>>, vector<1x128xf32>
    %c0_2 = arith.constant 0 : index
    %c256 = arith.constant 256 : index
    %2 = vector.load %arg5[%c0_2, %c256] : memref<8x512xf32, #tpu.memory_space<vmem>>, vector<1x128xf32>
    %c0_3 = arith.constant 0 : index
    %c384 = arith.constant 384 : index
    %3 = vector.load %arg5[%c0_3, %c384] : memref<8x512xf32, #tpu.memory_space<vmem>>, vector<1x128xf32>
    %c1 = arith.constant 1 : index
    %c0_4 = arith.constant 0 : index
    %4 = vector.load %arg5[%c1, %c0_4] : memref<8x512xf32, #tpu.memory_space<vmem>>, vector<1x128xf32>
    %c1_5 = arith.constant 1 : index
    %c128_6 = arith.constant 128 : index
    %5 = vector.load %arg5[%c1_5, %c128_6] : memref<8x512xf32, #tpu.memory_space<vmem>>, vector<1x128xf32>
    %c1_7 = arith.constant 1 : index
    %c256_8 = arith.constant 256 : index
    %6 = vector.load %arg5[%c1_7, %c256_8] : memref<8x512xf32, #tpu.memory_space<vmem>>, vector<1x128xf32>
    %c1_9 = arith.constant 1 : index
    %c384_10 = arith.constant 384 : index
    %7 = vector.load %arg5[%c1_9, %c384_10] : memref<8x512xf32, #tpu.memory_space<vmem>>, vector<1x128xf32>
    %c2 = arith.constant 2 : index
    %c0_11 = arith.constant 0 : index
    %8 = vector.load %arg5[%c2, %c0_11] : memref<8x512xf32, #tpu.memory_space<vmem>>, vector<1x512xf32>
    %c3 = arith.constant 3 : index
    %c0_12 = arith.constant 0 : index
    %9 = vector.load %arg5[%c3, %c0_12] : memref<8x512xf32, #tpu.memory_space<vmem>>, vector<1x256xf32>
    %c4 = arith.constant 4 : index
    %c0_13 = arith.constant 0 : index
    %10 = vector.load %arg5[%c4, %c0_13] : memref<8x512xf32, #tpu.memory_space<vmem>>, vector<4x128xf32>
    %c0_14 = arith.constant 0 : index
    %c0_15 = arith.constant 0 : index
    %11 = vector.load %arg3[%c0_14, %c0_15] : memref<1936x128xbf16, #tpu.memory_space<vmem>>, vector<128x128xbf16>
    %c128_16 = arith.constant 128 : index
    %c0_17 = arith.constant 0 : index
    %12 = vector.load %arg3[%c128_16, %c0_17] : memref<1936x128xbf16, #tpu.memory_space<vmem>>, vector<128x128xbf16>
    %c256_18 = arith.constant 256 : index
    %c0_19 = arith.constant 0 : index
    %13 = vector.load %arg3[%c256_18, %c0_19] : memref<1936x128xbf16, #tpu.memory_space<vmem>>, vector<16x128xbf16>
    %c272 = arith.constant 272 : index
    %c0_20 = arith.constant 0 : index
    %14 = vector.load %arg3[%c272, %c0_20] : memref<1936x128xbf16, #tpu.memory_space<vmem>>, vector<128x128xbf16>
    %c400 = arith.constant 400 : index
    %c0_21 = arith.constant 0 : index
    %15 = vector.load %arg3[%c400, %c0_21] : memref<1936x128xbf16, #tpu.memory_space<vmem>>, vector<128x128xbf16>
    %c528 = arith.constant 528 : index
    %c0_22 = arith.constant 0 : index
    %16 = vector.load %arg3[%c528, %c0_22] : memref<1936x128xbf16, #tpu.memory_space<vmem>>, vector<128x128xbf16>
    %c656 = arith.constant 656 : index
    %c0_23 = arith.constant 0 : index
    %17 = vector.load %arg3[%c656, %c0_23] : memref<1936x128xbf16, #tpu.memory_space<vmem>>, vector<1024x128xbf16>
    %c1680 = arith.constant 1680 : index
    %c0_24 = arith.constant 0 : index
    %18 = vector.load %arg3[%c1680, %c0_24] : memref<1936x128xbf16, #tpu.memory_space<vmem>>, vector<128x128xbf16>
    %c1808 = arith.constant 1808 : index
    %c0_25 = arith.constant 0 : index
    %19 = vector.load %arg3[%c1808, %c0_25] : memref<1936x128xbf16, #tpu.memory_space<vmem>>, vector<128x128xbf16>
    %c0_26 = arith.constant 0 : index
    %c0_27 = arith.constant 0 : index
    %20 = vector.load %arg4[%c0_26, %c0_27] : memref<640x512xbf16, #tpu.memory_space<vmem>>, vector<128x512xbf16>
    %c128_28 = arith.constant 128 : index
    %c0_29 = arith.constant 0 : index
    %21 = vector.load %arg4[%c128_28, %c0_29] : memref<640x512xbf16, #tpu.memory_space<vmem>>, vector<512x256xbf16>
    %c0_30 = arith.constant 0 : index
    %c0_31 = arith.constant 0 : index
    %22 = vector.load %arg1[%c0_30, %c0_31] : memref<64x4xf32, #tpu.memory_space<vmem>>, vector<64x4xf32>
    %23 = vector.extract_strided_slice %22 {offsets = [0, 0], sizes = [64, 1], strides = [1, 1]} : vector<64x4xf32> to vector<64x1xf32>
    %24 = vector.extract_strided_slice %10 {offsets = [0, 0], sizes = [1, 128], strides = [1, 1]} : vector<4x128xf32> to vector<1x128xf32>
    %25 = vector.broadcast %23 : vector<64x1xf32> to vector<64x128xf32>
    %26 = vector.broadcast %24 : vector<1x128xf32> to vector<64x128xf32>
    %27 = arith.mulf %25, %26 : vector<64x128xf32>
    %28 = vector.broadcast %0 : vector<1x128xf32> to vector<64x128xf32>
    %29 = arith.addf %28, %27 : vector<64x128xf32>
    %30 = vector.extract_strided_slice %22 {offsets = [0, 1], sizes = [64, 1], strides = [1, 1]} : vector<64x4xf32> to vector<64x1xf32>
    %31 = vector.extract_strided_slice %10 {offsets = [1, 0], sizes = [1, 128], strides = [1, 1]} : vector<4x128xf32> to vector<1x128xf32>
    %32 = vector.broadcast %30 : vector<64x1xf32> to vector<64x128xf32>
    %33 = vector.broadcast %31 : vector<1x128xf32> to vector<64x128xf32>
    %34 = arith.mulf %32, %33 : vector<64x128xf32>
    %35 = arith.addf %29, %34 : vector<64x128xf32>
    %36 = vector.extract_strided_slice %22 {offsets = [0, 2], sizes = [64, 1], strides = [1, 1]} : vector<64x4xf32> to vector<64x1xf32>
    %37 = vector.extract_strided_slice %10 {offsets = [2, 0], sizes = [1, 128], strides = [1, 1]} : vector<4x128xf32> to vector<1x128xf32>
    %38 = vector.broadcast %36 : vector<64x1xf32> to vector<64x128xf32>
    %39 = vector.broadcast %37 : vector<1x128xf32> to vector<64x128xf32>
    %40 = arith.mulf %38, %39 : vector<64x128xf32>
    %41 = arith.addf %35, %40 : vector<64x128xf32>
    %42 = vector.extract_strided_slice %22 {offsets = [0, 3], sizes = [64, 1], strides = [1, 1]} : vector<64x4xf32> to vector<64x1xf32>
    %43 = vector.extract_strided_slice %10 {offsets = [3, 0], sizes = [1, 128], strides = [1, 1]} : vector<4x128xf32> to vector<1x128xf32>
    %44 = vector.broadcast %42 : vector<64x1xf32> to vector<64x128xf32>
    %45 = vector.broadcast %43 : vector<1x128xf32> to vector<64x128xf32>
    %46 = arith.mulf %44, %45 : vector<64x128xf32>
    %47 = arith.addf %41, %46 : vector<64x128xf32>
    %cst = arith.constant 0.000000e+00 : f32
    %48 = vector.broadcast %cst : f32 to vector<64x128xf32>
    %49 = arith.maximumf %47, %48 : vector<64x128xf32>
    %50 = arith.truncf %49 : vector<64x128xf32> to vector<64x128xbf16>
    %cst_32 = arith.constant dense<0.000000e+00> : vector<64x128xf32>
    %51 = tpu.matmul %50, %11, %cst_32 {dimension_numbers = #tpu.dot_dimension_numbers<[1], [0], [0], [1], [0, 0, 1, 1], [], []>} : vector<64x128xbf16>, vector<128x128xbf16>, vector<64x128xf32> -> vector<64x128xf32>
    %52 = vector.broadcast %1 : vector<1x128xf32> to vector<64x128xf32>
    %53 = arith.addf %51, %52 : vector<64x128xf32>
    %cst_33 = arith.constant 0.000000e+00 : f32
    %54 = vector.broadcast %cst_33 : f32 to vector<64x128xf32>
    %55 = arith.maximumf %53, %54 : vector<64x128xf32>
    %56 = arith.truncf %55 : vector<64x128xf32> to vector<64x128xbf16>
    %cst_34 = arith.constant dense<0.000000e+00> : vector<64x128xf32>
    %57 = tpu.matmul %56, %12, %cst_34 {dimension_numbers = #tpu.dot_dimension_numbers<[1], [0], [0], [1], [0, 0, 1, 1], [], []>} : vector<64x128xbf16>, vector<128x128xbf16>, vector<64x128xf32> -> vector<64x128xf32>
    %c0_35 = arith.constant 0 : index
    %c0_36 = arith.constant 0 : index
    %58 = vector.load %arg2[%c0_35, %c0_36] : memref<64x16xbf16, #tpu.memory_space<vmem>>, vector<64x16xbf16>
    %cst_37 = arith.constant dense<0.000000e+00> : vector<64x128xf32>
    %59 = tpu.matmul %58, %13, %cst_37 {dimension_numbers = #tpu.dot_dimension_numbers<[1], [0], [0], [1], [0, 0, 1, 1], [], []>} : vector<64x16xbf16>, vector<16x128xbf16>, vector<64x128xf32> -> vector<64x128xf32>
    %60 = arith.addf %57, %59 : vector<64x128xf32>
    %61 = vector.broadcast %2 : vector<1x128xf32> to vector<64x128xf32>
    %62 = arith.addf %60, %61 : vector<64x128xf32>
    %cst_38 = arith.constant 0.000000e+00 : f32
    %63 = vector.broadcast %cst_38 : f32 to vector<64x128xf32>
    %64 = arith.maximumf %62, %63 : vector<64x128xf32>
    %65 = vector.shape_cast %64 : vector<64x128xf32> to vector<2x4x8x128xf32>
    %cst_39 = arith.constant dense<0.000000e+00> : vector<2x8x128xf32>
    %66 = vector.multi_reduction <add>, %65, %cst_39 [1] : vector<2x4x8x128xf32> to vector<2x8x128xf32>
    %67 = vector.shape_cast %66 : vector<2x8x128xf32> to vector<2x1x8x128xf32>
    %68 = vector.broadcast %67 : vector<2x1x8x128xf32> to vector<2x4x8x128xf32>
    %69 = arith.subf %68, %65 : vector<2x4x8x128xf32>
    %cst_40 = arith.constant 0.333333343 : f32
    %70 = vector.broadcast %cst_40 : f32 to vector<2x4x8x128xf32>
    %71 = arith.mulf %69, %70 : vector<2x4x8x128xf32>
    %72 = vector.shape_cast %71 : vector<2x4x8x128xf32> to vector<64x128xf32>
    %73 = arith.truncf %64 : vector<64x128xf32> to vector<64x128xbf16>
    %cst_41 = arith.constant dense<0.000000e+00> : vector<64x128xf32>
    %74 = tpu.matmul %73, %14, %cst_41 {dimension_numbers = #tpu.dot_dimension_numbers<[1], [0], [0], [1], [0, 0, 1, 1], [], []>} : vector<64x128xbf16>, vector<128x128xbf16>, vector<64x128xf32> -> vector<64x128xf32>
    %75 = arith.truncf %72 : vector<64x128xf32> to vector<64x128xbf16>
    %cst_42 = arith.constant dense<0.000000e+00> : vector<64x128xf32>
    %76 = tpu.matmul %75, %15, %cst_42 {dimension_numbers = #tpu.dot_dimension_numbers<[1], [0], [0], [1], [0, 0, 1, 1], [], []>} : vector<64x128xbf16>, vector<128x128xbf16>, vector<64x128xf32> -> vector<64x128xf32>
    %77 = arith.addf %74, %76 : vector<64x128xf32>
    %78 = vector.broadcast %3 : vector<1x128xf32> to vector<64x128xf32>
    %79 = arith.addf %77, %78 : vector<64x128xf32>
    %cst_43 = arith.constant 0.000000e+00 : f32
    %80 = vector.broadcast %cst_43 : f32 to vector<64x128xf32>
    %81 = arith.maximumf %79, %80 : vector<64x128xf32>
    %82 = arith.truncf %81 : vector<64x128xf32> to vector<64x128xbf16>
    %cst_44 = arith.constant dense<0.000000e+00> : vector<64x128xf32>
    %83 = tpu.matmul %82, %16, %cst_44 {dimension_numbers = #tpu.dot_dimension_numbers<[1], [0], [0], [1], [0, 0, 1, 1], [], []>} : vector<64x128xbf16>, vector<128x128xbf16>, vector<64x128xf32> -> vector<64x128xf32>
    %84 = vector.broadcast %4 : vector<1x128xf32> to vector<64x128xf32>
    %85 = arith.addf %83, %84 : vector<64x128xf32>
    %cst_45 = arith.constant 0.000000e+00 : f32
    %86 = vector.broadcast %cst_45 : f32 to vector<64x128xf32>
    %87 = arith.maximumf %85, %86 : vector<64x128xf32>
    %88 = vector.shape_cast %87 : vector<64x128xf32> to vector<8x8x128xf32>
    %89 = vector.extract_strided_slice %88 {offsets = [0, 0, 0], sizes = [8, 1, 128], strides = [1, 1, 1]} : vector<8x8x128xf32> to vector<8x1x128xf32>
    %90 = vector.shape_cast %89 : vector<8x1x128xf32> to vector<8x128xf32>
    %91 = vector.extract_strided_slice %88 {offsets = [0, 1, 0], sizes = [8, 1, 128], strides = [1, 1, 1]} : vector<8x8x128xf32> to vector<8x1x128xf32>
    %92 = vector.shape_cast %91 : vector<8x1x128xf32> to vector<8x128xf32>
    %93 = vector.extract_strided_slice %88 {offsets = [0, 2, 0], sizes = [8, 1, 128], strides = [1, 1, 1]} : vector<8x8x128xf32> to vector<8x1x128xf32>
    %94 = vector.shape_cast %93 : vector<8x1x128xf32> to vector<8x128xf32>
    %95 = vector.extract_strided_slice %88 {offsets = [0, 3, 0], sizes = [8, 1, 128], strides = [1, 1, 1]} : vector<8x8x128xf32> to vector<8x1x128xf32>
    %96 = vector.shape_cast %95 : vector<8x1x128xf32> to vector<8x128xf32>
    %97 = vector.extract_strided_slice %88 {offsets = [0, 4, 0], sizes = [8, 1, 128], strides = [1, 1, 1]} : vector<8x8x128xf32> to vector<8x1x128xf32>
    %98 = vector.shape_cast %97 : vector<8x1x128xf32> to vector<8x128xf32>
    %99 = vector.extract_strided_slice %88 {offsets = [0, 5, 0], sizes = [8, 1, 128], strides = [1, 1, 1]} : vector<8x8x128xf32> to vector<8x1x128xf32>
    %100 = vector.shape_cast %99 : vector<8x1x128xf32> to vector<8x128xf32>
    %101 = vector.extract_strided_slice %88 {offsets = [0, 6, 0], sizes = [8, 1, 128], strides = [1, 1, 1]} : vector<8x8x128xf32> to vector<8x1x128xf32>
    %102 = vector.shape_cast %101 : vector<8x1x128xf32> to vector<8x128xf32>
    %103 = vector.extract_strided_slice %88 {offsets = [0, 7, 0], sizes = [8, 1, 128], strides = [1, 1, 1]} : vector<8x8x128xf32> to vector<8x1x128xf32>
    %104 = vector.shape_cast %103 : vector<8x1x128xf32> to vector<8x128xf32>
    %105 = tpu.concatenate %90, %92, %94, %96, %98, %100, %102, %104 in 1 : vector<8x128xf32>, vector<8x128xf32>, vector<8x128xf32>, vector<8x128xf32>, vector<8x128xf32>, vector<8x128xf32>, vector<8x128xf32>, vector<8x128xf32> -> vector<8x1024xf32>
    %106 = arith.truncf %105 : vector<8x1024xf32> to vector<8x1024xbf16>
    %cst_46 = arith.constant dense<0.000000e+00> : vector<8x128xf32>
    %107 = tpu.matmul %106, %17, %cst_46 {dimension_numbers = #tpu.dot_dimension_numbers<[1], [0], [0], [1], [0, 0, 1, 1], [], []>} : vector<8x1024xbf16>, vector<1024x128xbf16>, vector<8x128xf32> -> vector<8x128xf32>
    %108 = vector.broadcast %5 : vector<1x128xf32> to vector<8x128xf32>
    %109 = arith.addf %107, %108 : vector<8x128xf32>
    %cst_47 = arith.constant 0.000000e+00 : f32
    %110 = vector.broadcast %cst_47 : f32 to vector<8x128xf32>
    %111 = arith.maximumf %109, %110 : vector<8x128xf32>
    %112 = arith.truncf %111 : vector<8x128xf32> to vector<8x128xbf16>
    %cst_48 = arith.constant dense<0.000000e+00> : vector<8x128xf32>
    %113 = tpu.matmul %112, %18, %cst_48 {dimension_numbers = #tpu.dot_dimension_numbers<[1], [0], [0], [1], [0, 0, 1, 1], [], []>} : vector<8x128xbf16>, vector<128x128xbf16>, vector<8x128xf32> -> vector<8x128xf32>
    %114 = vector.broadcast %6 : vector<1x128xf32> to vector<8x128xf32>
    %115 = arith.addf %113, %114 : vector<8x128xf32>
    %cst_49 = arith.constant 0.000000e+00 : f32
    %116 = vector.broadcast %cst_49 : f32 to vector<8x128xf32>
    %117 = arith.maximumf %115, %116 : vector<8x128xf32>
    %118 = vector.shape_cast %117 : vector<8x128xf32> to vector<2x4x128xf32>
    %cst_50 = arith.constant dense<0.000000e+00> : vector<2x128xf32>
    %119 = vector.multi_reduction <add>, %118, %cst_50 [1] : vector<2x4x128xf32> to vector<2x128xf32>
    %cst_51 = arith.constant 2.500000e-01 : f32
    %120 = vector.broadcast %cst_51 : f32 to vector<2x128xf32>
    %121 = arith.mulf %119, %120 : vector<2x128xf32>
    %122 = arith.truncf %121 : vector<2x128xf32> to vector<2x128xbf16>
    %cst_52 = arith.constant dense<0.000000e+00> : vector<2x128xf32>
    %123 = tpu.matmul %122, %19, %cst_52 {dimension_numbers = #tpu.dot_dimension_numbers<[1], [0], [0], [1], [0, 0, 1, 1], [], []>} : vector<2x128xbf16>, vector<128x128xbf16>, vector<2x128xf32> -> vector<2x128xf32>
    %124 = vector.broadcast %7 : vector<1x128xf32> to vector<2x128xf32>
    %125 = arith.addf %123, %124 : vector<2x128xf32>
    %cst_53 = arith.constant 0.000000e+00 : f32
    %126 = vector.broadcast %cst_53 : f32 to vector<2x128xf32>
    %127 = arith.maximumf %125, %126 : vector<2x128xf32>
    %128 = arith.truncf %127 : vector<2x128xf32> to vector<2x128xbf16>
    %cst_54 = arith.constant dense<0.000000e+00> : vector<2x512xf32>
    %129 = tpu.matmul %128, %20, %cst_54 {dimension_numbers = #tpu.dot_dimension_numbers<[1], [0], [0], [1], [0, 0, 1, 1], [], []>} : vector<2x128xbf16>, vector<128x512xbf16>, vector<2x512xf32> -> vector<2x512xf32>
    %130 = vector.broadcast %8 : vector<1x512xf32> to vector<2x512xf32>
    %131 = arith.addf %129, %130 : vector<2x512xf32>
    %cst_55 = arith.constant 0.000000e+00 : f32
    %132 = vector.broadcast %cst_55 : f32 to vector<2x512xf32>
    %133 = arith.maximumf %131, %132 : vector<2x512xf32>
    %134 = arith.truncf %133 : vector<2x512xf32> to vector<2x512xbf16>
    %cst_56 = arith.constant dense<0.000000e+00> : vector<2x256xf32>
    %135 = tpu.matmul %134, %21, %cst_56 {dimension_numbers = #tpu.dot_dimension_numbers<[1], [0], [0], [1], [0, 0, 1, 1], [], []>} : vector<2x512xbf16>, vector<512x256xbf16>, vector<2x256xf32> -> vector<2x256xf32>
    %136 = vector.broadcast %9 : vector<1x256xf32> to vector<2x256xf32>
    %137 = arith.addf %135, %136 : vector<2x256xf32>
    %c0_57 = arith.constant 0 : index
    %c0_58 = arith.constant 0 : index
    %138 = vector.load %arg6[%c0_57, %c0_58] : memref<2x256xf32, #tpu.memory_space<vmem>>, vector<2x256xf32>
    tpu.vector_store %arg6[%c0_57, %c0_58], %137 {strides = array<i32>} : memref<2x256xf32, #tpu.memory_space<vmem>>, vector<2x256xf32>,
    return
  }
  func.func @transform_0(%arg0: i32) -> (i32, i32) {
    %c0_i32 = arith.constant 0 : i32
    %c0_i32_0 = arith.constant 0 : i32
    return %arg0, %c0_i32 : i32, i32
  }
  func.func @transform_1(%arg0: i32) -> (i32, i32) {
    %c0_i32 = arith.constant 0 : i32
    %c0_i32_0 = arith.constant 0 : i32
    return %arg0, %c0_i32 : i32, i32
  }
  func.func @transform_2(%arg0: i32) -> (i32, i32) {
    %c0_i32 = arith.constant 0 : i32
    %c0_i32_0 = arith.constant 0 : i32
    %c0_i32_1 = arith.constant 0 : i32
    return %c0_i32, %c0_i32_0 : i32, i32
  }
  func.func @transform_3(%arg0: i32) -> (i32, i32) {
    %c0_i32 = arith.constant 0 : i32
    %c0_i32_0 = arith.constant 0 : i32
    %c0_i32_1 = arith.constant 0 : i32
    return %c0_i32, %c0_i32_0 : i32, i32
  }
  func.func @transform_4(%arg0: i32) -> (i32, i32) {
    %c0_i32 = arith.constant 0 : i32
    %c0_i32_0 = arith.constant 0 : i32
    %c0_i32_1 = arith.constant 0 : i32
    return %c0_i32, %c0_i32_0 : i32, i32
  }
  func.func @transform_5(%arg0: i32) -> (i32, i32) {
    %c0_i32 = arith.constant 0 : i32
    %c0_i32_0 = arith.constant 0 : i32
    return %arg0, %c0_i32 : i32, i32
  }
}

</mosaic_0001>

<llo_original>
// kernel: eq.1
$region0: #{eq.1}
  %s0 = inlined_call_operand.vmem [shape: s32[2,4,8], index: 0, kind: input, shape index: {}]
  %s1 = inlined_call_operand.vmem [shape: s32[64], index: 1, kind: output, shape index: {}]
  $region1: #{eq.1} parent=0
    #allocation0 [shape = 'u8[4096]{0}', space=vmem, size = 0x1000, scoped, tag = 'scoped mem for output reshape']
    #allocation1 [shape = 'u8[8192]{0}', space=vmem, size = 0x2000, scoped, tag = 'scoped mem for input reshape']
    %s3 = sshllo.u32 0, 4
    %s4 = scalar_lea.vmem %s0, 4
    %v5 = vld [vmem:[%s4] sm:%s3]
    %s6 = scalar_lea.vmem [#allocation1], 8
    %7 = vst [vmem:[%s6] sm:%s3] %v5
    %v8 = vld [vmem:[%s0] sm:%s3]
    %9 = vst [vmem:[#allocation1] sm:%s3] %v8
    %v10 = vld [vmem:[#allocation1] sm:$0x1]
    %vm11 = vcmask 64512
    %12 = vst.msk [vmem:[#allocation0] sm:$0x1] %vm11, %v10
    %s13 = scalar_lea.vmem [#allocation1], 11
    %v14 = vld [vmem:[%s13] sm:$0x1]
    %15 = vrot.lane.b32.xlu0 %v14, 56
    %v16 = vpop.permute.xlu0 %15
    %vm17 = vcmask 523712
    %18 = vst.msk [vmem:[#allocation0] sm:$0x1] %vm17, %v16
    %s19 = scalar_lea.vmem [#allocation1], 10
    %v20 = vld [vmem:[%s19] sm:$0x1]
    %21 = vrot.lane.b32.xlu0 %v20, 48
    %v22 = vpop.permute.xlu0 %21
    %vm23 = vcmask 458112
    %24 = vst.msk [vmem:[#allocation0] sm:$0x1] %vm23, %v22
    %s25 = scalar_lea.vmem [#allocation1], 9
    %v26 = vld [vmem:[%s25] sm:$0x1]
    %27 = vrot.lane.b32.xlu0 %v26, 40
    %v28 = vpop.permute.xlu0 %27
    %vm29 = vcmask 392512
    %30 = vst.msk [vmem:[#allocation0] sm:$0x1] %vm29, %v28
    %s31 = scalar_lea.vmem [#allocation1], 8
    %v32 = vld [vmem:[%s31] sm:$0x1]
    %33 = vrot.lane.b32.xlu0 %v32, 32
    %v34 = vpop.permute.xlu0 %33
    %vm35 = vcmask 326912
    %36 = vst.msk [vmem:[#allocation0] sm:$0x1] %vm35, %v34
    %s37 = scalar_lea.vmem [#allocation1], 3
    %v38 = vld [vmem:[%s37] sm:$0x1]
    %39 = vrot.lane.b32.xlu0 %v38, 24
    %v40 = vpop.permute.xlu0 %39
    %vm41 = vcmask 261312
    %42 = vst.msk [vmem:[#allocation0] sm:$0x1] %vm41, %v40
    %s43 = scalar_lea.vmem [#allocation1], 2
    %v44 = vld [vmem:[%s43] sm:$0x1]
    %45 = vrot.lane.b32.xlu0 %v44, 16
    %v46 = vpop.permute.xlu0 %45
    %vm47 = vcmask 195712
    %48 = vst.msk [vmem:[#allocation0] sm:$0x1] %vm47, %v46
    %s49 = scalar_lea.vmem [#allocation1], 1
    %v50 = vld [vmem:[%s49] sm:$0x1]
    %51 = vrot.lane.b32.xlu0 %v50, 8
    %v52 = vpop.permute.xlu0 %51
    %vm53 = vcmask 130112
    %54 = vst.msk [vmem:[#allocation0] sm:$0x1] %vm53, %v52
    %s56 = sshllo.u32 0, 1
    %v58 = vld [vmem:[#allocation0] sm:%s56]
    %s59 = sshllo.u32 0, 1
    %60 = vst [vmem:[%s1] sm:%s59] %v58

// kernel: stin_forward.1
$region0: #{stin_forward.1}
  #allocation0 [shape = 'u32[]', space=smem, size = 0x4, offset = 0x4, fixed_abs, tag = 'smem constant byte address 0x4 - core index']
  #allocation1 [shape = 'u32[144,128]{1,0:T(1,128)}', space=vmem, size = 0x12000, scoped, tag = 'internal scratch']
  %s0 = inlined_call_operand.vmem [shape: f32[64,4], index: 0, kind: input, shape index: {}]
  %s1 = inlined_call_operand.vmem [shape: bf16[64,16], index: 1, kind: input, shape index: {}]
  %s2 = inlined_call_operand.hbm [shape: bf16[1936,128], index: 2, kind: input, shape index: {}]
  %s3 = inlined_call_operand.hbm [shape: bf16[640,512], index: 3, kind: input, shape index: {}]
  %s4 = inlined_call_operand.vmem [shape: f32[8,512], index: 4, kind: input, shape index: {}]
  %s5 = inlined_call_operand.hbm [shape: f32[2,256], index: 5, kind: output, shape index: {}]
  %s6 = sld [smem:[#allocation0]]
  $region38: #{stin_forward.1} parent=0
    _
  %s8 = ssub.s32 1, %s6
  %s9 = scalar_select 0, %s8, %s6
  $region1: #{stin_forward.1} parent=0
    #allocation2 [shape = 'u8[495616]{0}', space=vmem, size = 0x79000, scoped, tag = 'input window, operand 2, single buffered']
    #allocation3 [shape = 's32[1]{0}', space=sflag, size = 0x4, scoped, tag = 'scoped memory for stin_forward.1']
    #allocation4 [shape = 's32[1]{0}', space=sflag, size = 0x4, scoped, tag = 'scoped memory for stin_forward.1']
    #allocation5 [shape = 'u8[655360]{0}', space=vmem, size = 0xa0000, scoped, tag = 'input window, operand 3, single buffered']
    #allocation6 [shape = 's32[1]{0}', space=sflag, size = 0x4, scoped, tag = 'scoped memory for stin_forward.1']
    #allocation7 [shape = 'u8[2048]{0}', space=vmem, size = 0x800, scoped, tag = 'output window, operand 0, single buffered']
    %10 = vsyncpa [#allocation3], 0
    %11 = vsyncpa [#allocation6], 0
    %12 = vsyncpa [#allocation4], 0
    // Predicated region
    $region2: #{stin_forward.1} parent=1 // pred_check
      _
    $region3: #{stin_forward.1} parent=1 // pred_check_branch
      %14 = sbr.rel (0) target = $region5
    $region4: #{stin_forward.1} parent=1 // pred_region
      _
    $region5: #{stin_forward.1} parent=1 // pred_fallthru
      _
    // Predicated region
    $region6: #{stin_forward.1} parent=1 // pred_check
      _
    $region7: #{stin_forward.1} parent=1 // pred_check_branch
      %16 = sbr.rel (0) target = $region9
    $region8: #{stin_forward.1} parent=1 // pred_region
      _
    $region9: #{stin_forward.1} parent=1 // pred_fallthru
      _
    // Predicated region
    $region10: #{stin_forward.1} parent=1 // pred_check
      _
    $region11: #{stin_forward.1} parent=1 // pred_check_branch
      %18 = sbr.rel (0) target = $region13
    $region12: #{stin_forward.1} parent=1 // pred_region
      %s20 = ssub.s32 15488, 15488
      %21 = vsyncadd [#allocation3], %s20
      %s22 = sshll.u32 [#allocation2], 4
      %s23 = int_to_ptr.vmem [resolvable:$true] %s22
      %28 = dma.hbm_to_vmem [thread:$0]  %s2, 15488, %s23, [#allocation3], 64, 64, 4
    $region13: #{stin_forward.1} parent=1 // pred_fallthru
      _
    // Predicated region
    $region14: #{stin_forward.1} parent=1 // pred_check
      _
    $region15: #{stin_forward.1} parent=1 // pred_check_branch
      %30 = sbr.rel (0) target = $region17
    $region16: #{stin_forward.1} parent=1 // pred_region
      %s32 = ssub.s32 20480, 20480
      %33 = vsyncadd [#allocation6], %s32
      %s34 = sshll.u32 [#allocation5], 4
      %s35 = int_to_ptr.vmem [resolvable:$true] %s34
      %40 = dma.hbm_to_vmem [thread:$0]  %s3, 20480, %s35, [#allocation6], 256, 256, 16
    $region17: #{stin_forward.1} parent=1 // pred_fallthru
      _
    // Predicated region
    $region18: #{stin_forward.1} parent=1 // pred_check
      _
    $region19: #{stin_forward.1} parent=1 // pred_check_branch
      %42 = sbr.rel (0) target = $region21
    $region20: #{stin_forward.1} parent=1 // pred_region
      _
    $region21: #{stin_forward.1} parent=1 // pred_fallthru
      _
    // Predicated region
    $region22: #{stin_forward.1} parent=1 // pred_check
      _
    $region23: #{stin_forward.1} parent=1 // pred_check_branch
      %44 = sbr.rel (0) target = $region25
    $region24: #{stin_forward.1} parent=1 // pred_region
      %45 = dma.done [#allocation3], 15488
    $region25: #{stin_forward.1} parent=1 // pred_fallthru
      _
    // Predicated region
    $region26: #{stin_forward.1} parent=1 // pred_check
      _
    $region27: #{stin_forward.1} parent=1 // pred_check_branch
      %47 = sbr.rel (0) target = $region29
    $region28: #{stin_forward.1} parent=1 // pred_region
      %48 = dma.done [#allocation6], 20480
    $region29: #{stin_forward.1} parent=1 // pred_fallthru
      _
    %v50 = vld [vmem:[%s4] ss:$0 sm:$0xff]
    %v51 = vld [vmem:[%s4 + $0x8] ss:$0 sm:$0xff]
    %v52 = vld [vmem:[%s4 + $0x10] ss:$0 sm:$0xff]
    %v53 = vld [vmem:[%s4 + $0x18] ss:$0 sm:$0xff]
    %v54 = vld [vmem:[%s4 + $0x1] ss:$0 sm:$0xff]
    %v55 = vld [vmem:[%s4 + $0x9] ss:$0 sm:$0xff]
    %v56 = vld [vmem:[%s4 + $0x11] ss:$0 sm:$0xff]
    %v57 = vld [vmem:[%s4 + $0x19] ss:$0 sm:$0xff]
    %s58 = scalar_lea.vmem %s4, 2
    %v59 = vld [vmem:[%s58] ss:$8 sm:$0xf]
    %s60 = scalar_lea.vmem %s4, 3
    %v61 = vld [vmem:[%s60] ss:$8 sm:$0x3]
    %v62 = vld [vmem:[%s4] sm:$0xf0]
    %v63 = vld [vmem:[#allocation2] sm:$0xf]
    %v64 = vld [vmem:[#allocation2 + $0x4] sm:$0xf]
    %v65 = vld [vmem:[#allocation2 + $0x8] sm:$0xf]
    %v66 = vld [vmem:[#allocation2 + $0xc] sm:$0xf]
    %v67 = vld [vmem:[#allocation2 + $0x10] sm:$0xf]
    %v68 = vld [vmem:[#allocation2 + $0x14] sm:$0xf]
    %v69 = vld [vmem:[#allocation2 + $0x18] sm:$0xf]
    %v70 = vld [vmem:[#allocation2 + $0x1c] sm:$0xf]
    %v71 = vld [vmem:[#allocation2 + $0x20] sm:$0xf]
    %v72 = vld [vmem:[#allocation2 + $0x24] sm:$0xf]
    %v73 = vld [vmem:[#allocation2 + $0x28] sm:$0xf]
    %v74 = vld [vmem:[#allocation2 + $0x2c] sm:$0xf]
    %v75 = vld [vmem:[#allocation2 + $0x30] sm:$0xf]
    %v76 = vld [vmem:[#allocation2 + $0x34] sm:$0xf]
    %v77 = vld [vmem:[#allocation2 + $0x38] sm:$0xf]
    %v78 = vld [vmem:[#allocation2 + $0x3c] sm:$0xf]
    %v79 = vld [vmem:[#allocation2 + $0x40] sm:$0xf]
    %v80 = vld [vmem:[#allocation2 + $0x44] sm:$0xf]
    %v81 = vld [vmem:[#allocation2 + $0x48] sm:$0xf]
    %v82 = vld [vmem:[#allocation2 + $0x4c] sm:$0xf]
    %v83 = vld [vmem:[#allocation2 + $0x50] sm:$0xf]
    %v84 = vld [vmem:[#allocation2 + $0x54] sm:$0xf]
    %v85 = vld [vmem:[#allocation2 + $0x58] sm:$0xf]
    %v86 = vld [vmem:[#allocation2 + $0x5c] sm:$0xf]
    %v87 = vld [vmem:[#allocation2 + $0x60] sm:$0xf]
    %v88 = vld [vmem:[#allocation2 + $0x64] sm:$0xf]
    %v89 = vld [vmem:[#allocation2 + $0x68] sm:$0xf]
    %v90 = vld [vmem:[#allocation2 + $0x6c] sm:$0xf]
    %v91 = vld [vmem:[#allocation2 + $0x70] sm:$0xf]
    %v92 = vld [vmem:[#allocation2 + $0x74] sm:$0xf]
    %v93 = vld [vmem:[#allocation2 + $0x78] sm:$0xf]
    %v94 = vld [vmem:[#allocation2 + $0x7c] sm:$0xf]
    %v95 = vld [vmem:[#allocation2 + $0x80] sm:$0xf]
    %v96 = vld [vmem:[#allocation2 + $0x84] sm:$0xf]
    %v97 = vld [vmem:[#allocation2 + $0x88] sm:$0xf]
    %v98 = vld [vmem:[#allocation2 + $0x8c] sm:$0xf]
    %v99 = vld [vmem:[#allocation2 + $0x90] sm:$0xf]
    %v100 = vld [vmem:[#allocation2 + $0x94] sm:$0xf]
    %v101 = vld [vmem:[#allocation2 + $0x98] sm:$0xf]
    %v102 = vld [vmem:[#allocation2 + $0x9c] sm:$0xf]
    %v103 = vld [vmem:[#allocation2 + $0xa0] sm:$0xf]
    %v104 = vld [vmem:[#allocation2 + $0xa4] sm:$0xf]
    %v105 = vld [vmem:[#allocation2 + $0xa8] sm:$0xf]
    %v106 = vld [vmem:[#allocation2 + $0xac] sm:$0xf]
    %v107 = vld [vmem:[#allocation2 + $0xb0] sm:$0xf]
    %v108 = vld [vmem:[#allocation2 + $0xb4] sm:$0xf]
    %v109 = vld [vmem:[#allocation2 + $0xb8] sm:$0xf]
    %v110 = vld [vmem:[#allocation2 + $0xbc] sm:$0xf]
    %v111 = vld [vmem:[#allocation2 + $0xc0] sm:$0xf]
    %v112 = vld [vmem:[#allocation2 + $0xc4] sm:$0xf]
    %v113 = vld [vmem:[#allocation2 + $0xc8] sm:$0xf]
    %v114 = vld [vmem:[#allocation2 + $0xcc] sm:$0xf]
    %v115 = vld [vmem:[#allocation2 + $0xd0] sm:$0xf]
    %v116 = vld [vmem:[#allocation2 + $0xd4] sm:$0xf]
    %v117 = vld [vmem:[#allocation2 + $0xd8] sm:$0xf]
    %v118 = vld [vmem:[#allocation2 + $0xdc] sm:$0xf]
    %v119 = vld [vmem:[#allocation2 + $0xe0] sm:$0xf]
    %v120 = vld [vmem:[#allocation2 + $0xe4] sm:$0xf]
    %v121 = vld [vmem:[#allocation2 + $0xe8] sm:$0xf]
    %v122 = vld [vmem:[#allocation2 + $0xec] sm:$0xf]
    %v123 = vld [vmem:[#allocation2 + $0xf0] sm:$0xf]
    %v124 = vld [vmem:[#allocation2 + $0xf4] sm:$0xf]
    %v125 = vld [vmem:[#allocation2 + $0xf8] sm:$0xf]
    %v126 = vld [vmem:[#allocation2 + $0xfc] sm:$0xf]
    %v127 = vld [vmem:[#allocation2 + $0x100] sm:$0xf]
    %v128 = vld [vmem:[#allocation2 + $0x104] sm:$0xf]
    %v129 = vld [vmem:[#allocation2 + $0x108] sm:$0xf]
    %v130 = vld [vmem:[#allocation2 + $0x10c] sm:$0xf]
    %v131 = vld [vmem:[#allocation2 + $0x110] sm:$0xf]
    %v132 = vld [vmem:[#allocation2 + $0x114] sm:$0xf]
    %v133 = vld [vmem:[#allocation2 + $0x118] sm:$0xf]
    %v134 = vld [vmem:[#allocation2 + $0x11c] sm:$0xf]
    %v135 = vld [vmem:[#allocation2 + $0x120] sm:$0xf]
    %v136 = vld [vmem:[#allocation2 + $0x124] sm:$0xf]
    %v137 = vld [vmem:[#allocation2 + $0x128] sm:$0xf]
    %v138 = vld [vmem:[#allocation2 + $0x12c] sm:$0xf]
    %v139 = vld [vmem:[#allocation2 + $0x130] sm:$0xf]
    %v140 = vld [vmem:[#allocation2 + $0x134] sm:$0xf]
    %v141 = vld [vmem:[#allocation2 + $0x138] sm:$0xf]
    %v142 = vld [vmem:[#allocation2 + $0x13c] sm:$0xf]
    %v143 = vld [vmem:[#allocation2 + $0x140] sm:$0xf]
    %v144 = vld [vmem:[#allocation2 + $0x144] sm:$0xf]
    %v145 = vld [vmem:[#allocation2 + $0x148] sm:$0xf]
    %v146 = vld [vmem:[#allocation2 + $0x14c] sm:$0xf]
    %v147 = vld [vmem:[#allocation2 + $0x150] sm:$0xf]
    %v148 = vld [vmem:[#allocation2 + $0x154] sm:$0xf]
    %v149 = vld [vmem:[#allocation2 + $0x158] sm:$0xf]
    %v150 = vld [vmem:[#allocation2 + $0x15c] sm:$0xf]
    %v151 = vld [vmem:[#allocation2 + $0x160] sm:$0xf]
    %v152 = vld [vmem:[#allocation2 + $0x164] sm:$0xf]
    %v153 = vld [vmem:[#allocation2 + $0x168] sm:$0xf]
    %v154 = vld [vmem:[#allocation2 + $0x16c] sm:$0xf]
    %v155 = vld [vmem:[#allocation2 + $0x170] sm:$0xf]
    %v156 = vld [vmem:[#allocation2 + $0x174] sm:$0xf]
    %v157 = vld [vmem:[#allocation2 + $0x178] sm:$0xf]
    %v158 = vld [vmem:[#allocation2 + $0x17c] sm:$0xf]
    %v159 = vld [vmem:[#allocation2 + $0x180] sm:$0xf]
    %v160 = vld [vmem:[#allocation2 + $0x184] sm:$0xf]
    %v161 = vld [vmem:[#allocation2 + $0x188] sm:$0xf]
    %v162 = vld [vmem:[#allocation2 + $0x18c] sm:$0xf]
    %v163 = vld [vmem:[#allocation2 + $0x190] sm:$0xf]
    %v164 = vld [vmem:[#allocation2 + $0x194] sm:$0xf]
    %v165 = vld [vmem:[#allocation2 + $0x198] sm:$0xf]
    %v166 = vld [vmem:[#allocation2 + $0x19c] sm:$0xf]
    %v167 = vld [vmem:[#allocation2 + $0x1a0] sm:$0xf]
    %v168 = vld [vmem:[#allocation2 + $0x1a4] sm:$0xf]
    %v169 = vld [vmem:[#allocation2 + $0x1a8] sm:$0xf]
    %v170 = vld [vmem:[#allocation2 + $0x1ac] sm:$0xf]
    %v171 = vld [vmem:[#allocation2 + $0x1b0] sm:$0xf]
    %v172 = vld [vmem:[#allocation2 + $0x1b4] sm:$0xf]
    %v173 = vld [vmem:[#allocation2 + $0x1b8] sm:$0xf]
    %v174 = vld [vmem:[#allocation2 + $0x1bc] sm:$0xf]
    %v175 = vld [vmem:[#allocation2 + $0x1c0] sm:$0xf]
    %v176 = vld [vmem:[#allocation2 + $0x1c4] sm:$0xf]
    %v177 = vld [vmem:[#allocation2 + $0x1c8] sm:$0xf]
    %v178 = vld [vmem:[#allocation2 + $0x1cc] sm:$0xf]
    %v179 = vld [vmem:[#allocation2 + $0x1d0] sm:$0xf]
    %v180 = vld [vmem:[#allocation2 + $0x1d4] sm:$0xf]
    %v181 = vld [vmem:[#allocation2 + $0x1d8] sm:$0xf]
    %v182 = vld [vmem:[#allocation2 + $0x1dc] sm:$0xf]
    %v183 = vld [vmem:[#allocation2 + $0x1e0] sm:$0xf]
    %v184 = vld [vmem:[#allocation2 + $0x1e4] sm:$0xf]
    %v185 = vld [vmem:[#allocation2 + $0x1e8] sm:$0xf]
    %v186 = vld [vmem:[#allocation2 + $0x1ec] sm:$0xf]
    %v187 = vld [vmem:[#allocation2 + $0x1f0] sm:$0xf]
    %v188 = vld [vmem:[#allocation2 + $0x1f4] sm:$0xf]
    %v189 = vld [vmem:[#allocation2 + $0x1f8] sm:$0xf]
    %v190 = vld [vmem:[#allocation2 + $0x1fc] sm:$0xf]
    %v191 = vld [vmem:[#allocation2 + $0x200] sm:$0xf]
    %v192 = vld [vmem:[#allocation2 + $0x204] sm:$0xf]
    %v193 = vld [vmem:[#allocation2 + $0x208] sm:$0xf]
    %v194 = vld [vmem:[#allocation2 + $0x20c] sm:$0xf]
    %v195 = vld [vmem:[#allocation2 + $0x210] sm:$0xf]
    %v196 = vld [vmem:[#allocation2 + $0x214] sm:$0xf]
    %v197 = vld [vmem:[#allocation2 + $0x218] sm:$0xf]
    %v198 = vld [vmem:[#allocation2 + $0x21c] sm:$0xf]
    %v199 = vld [vmem:[#allocation2 + $0x220] sm:$0xf]
    %v200 = vld [vmem:[#allocation2 + $0x224] sm:$0xf]
    %v201 = vld [vmem:[#allocation2 + $0x228] sm:$0xf]
    %v202 = vld [vmem:[#allocation2 + $0x22c] sm:$0xf]
    %v203 = vld [vmem:[#allocation2 + $0x230] sm:$0xf]
    %v204 = vld [vmem:[#allocation2 + $0x234] sm:$0xf]
    %v205 = vld [vmem:[#allocation2 + $0x238] sm:$0xf]
    %v206 = vld [vmem:[#allocation2 + $0x23c] sm:$0xf]
    %v207 = vld [vmem:[#allocation2 + $0x240] sm:$0xf]
    %v208 = vld [vmem:[#allocation2 + $0x244] sm:$0xf]
    %v209 = vld [vmem:[#allocation2 + $0x248] sm:$0xf]
    %v210 = vld [vmem:[#allocation2 + $0x24c] sm:$0xf]
    %v211 = vld [vmem:[#allocation2 + $0x250] sm:$0xf]
    %v212 = vld [vmem:[#allocation2 + $0x254] sm:$0xf]
    %v213 = vld [vmem:[#allocation2 + $0x258] sm:$0xf]
    %v214 = vld [vmem:[#allocation2 + $0x25c] sm:$0xf]
    %v215 = vld [vmem:[#allocation2 + $0x260] sm:$0xf]
    %v216 = vld [vmem:[#allocation2 + $0x264] sm:$0xf]
    %v217 = vld [vmem:[#allocation2 + $0x268] sm:$0xf]
    %v218 = vld [vmem:[#allocation2 + $0x26c] sm:$0xf]
    %v219 = vld [vmem:[#allocation2 + $0x270] sm:$0xf]
    %v220 = vld [vmem:[#allocation2 + $0x274] sm:$0xf]
    %v221 = vld [vmem:[#allocation2 + $0x278] sm:$0xf]
    %v222 = vld [vmem:[#allocation2 + $0x27c] sm:$0xf]
    %v223 = vld [vmem:[#allocation2 + $0x280] sm:$0xf]
    %v224 = vld [vmem:[#allocation2 + $0x284] sm:$0xf]
    %v225 = vld [vmem:[#allocation2 + $0x288] sm:$0xf]
    %v226 = vld [vmem:[#allocation2 + $0x28c] sm:$0xf]
    %v227 = vld [vmem:[#allocation2 + $0x290] sm:$0xf]
    %v228 = vld [vmem:[#allocation2 + $0x294] sm:$0xf]
    %v229 = vld [vmem:[#allocation2 + $0x298] sm:$0xf]
    %v230 = vld [vmem:[#allocation2 + $0x29c] sm:$0xf]
    %v231 = vld [vmem:[#allocation2 + $0x2a0] sm:$0xf]
    %v232 = vld [vmem:[#allocation2 + $0x2a4] sm:$0xf]
    %v233 = vld [vmem:[#allocation2 + $0x2a8] sm:$0xf]
    %v234 = vld [vmem:[#allocation2 + $0x2ac] sm:$0xf]
    %v235 = vld [vmem:[#allocation2 + $0x2b0] sm:$0xf]
    %v236 = vld [vmem:[#allocation2 + $0x2b4] sm:$0xf]
    %v237 = vld [vmem:[#allocation2 + $0x2b8] sm:$0xf]
    %v238 = vld [vmem:[#allocation2 + $0x2bc] sm:$0xf]
    %v239 = vld [vmem:[#allocation2 + $0x2c0] sm:$0xf]
    %v240 = vld [vmem:[#allocation2 + $0x2c4] sm:$0xf]
    %v241 = vld [vmem:[#allocation2 + $0x2c8] sm:$0xf]
    %v242 = vld [vmem:[#allocation2 + $0x2cc] sm:$0xf]
    %v243 = vld [vmem:[#allocation2 + $0x2d0] sm:$0xf]
    %v244 = vld [vmem:[#allocation2 + $0x2d4] sm:$0xf]
    %v245 = vld [vmem:[#allocation2 + $0x2d8] sm:$0xf]
    %v246 = vld [vmem:[#allocation2 + $0x2dc] sm:$0xf]
    %v247 = vld [vmem:[#allocation2 + $0x2e0] sm:$0xf]
    %v248 = vld [vmem:[#allocation2 + $0x2e4] sm:$0xf]
    %v249 = vld [vmem:[#allocation2 + $0x2e8] sm:$0xf]
    %v250 = vld [vmem:[#allocation2 + $0x2ec] sm:$0xf]
    %v251 = vld [vmem:[#allocation2 + $0x2f0] sm:$0xf]
    %v252 = vld [vmem:[#allocation2 + $0x2f4] sm:$0xf]
    %v253 = vld [vmem:[#allocation2 + $0x2f8] sm:$0xf]
    %v254 = vld [vmem:[#allocation2 + $0x2fc] sm:$0xf]
    %v255 = vld [vmem:[#allocation2 + $0x300] sm:$0xf]
    %v256 = vld [vmem:[#allocation2 + $0x304] sm:$0xf]
    %v257 = vld [vmem:[#allocation2 + $0x308] sm:$0xf]
    %v258 = vld [vmem:[#allocation2 + $0x30c] sm:$0xf]
    %v259 = vld [vmem:[#allocation2 + $0x310] sm:$0xf]
    %v260 = vld [vmem:[#allocation2 + $0x314] sm:$0xf]
    %v261 = vld [vmem:[#allocation2 + $0x318] sm:$0xf]
    %v262 = vld [vmem:[#allocation2 + $0x31c] sm:$0xf]
    %v263 = vld [vmem:[#allocation2 + $0x320] sm:$0xf]
    %v264 = vld [vmem:[#allocation2 + $0x324] sm:$0xf]
    %v265 = vld [vmem:[#allocation2 + $0x328] sm:$0xf]
    %v266 = vld [vmem:[#allocation2 + $0x32c] sm:$0xf]
    %v267 = vld [vmem:[#allocation2 + $0x330] sm:$0xf]
    %v268 = vld [vmem:[#allocation2 + $0x334] sm:$0xf]
    %v269 = vld [vmem:[#allocation2 + $0x338] sm:$0xf]
    %v270 = vld [vmem:[#allocation2 + $0x33c] sm:$0xf]
    %v271 = vld [vmem:[#allocation2 + $0x340] sm:$0xf]
    %v272 = vld [vmem:[#allocation2 + $0x344] sm:$0xf]
    %v273 = vld [vmem:[#allocation2 + $0x348] sm:$0xf]
    %v274 = vld [vmem:[#allocation2 + $0x34c] sm:$0xf]
    %v275 = vld [vmem:[#allocation2 + $0x350] sm:$0xf]
    %v276 = vld [vmem:[#allocation2 + $0x354] sm:$0xf]
    %v277 = vld [vmem:[#allocation2 + $0x358] sm:$0xf]
    %v278 = vld [vmem:[#allocation2 + $0x35c] sm:$0xf]
    %v279 = vld [vmem:[#allocation2 + $0x360] sm:$0xf]
    %v280 = vld [vmem:[#allocation2 + $0x364] sm:$0xf]
    %v281 = vld [vmem:[#allocation2 + $0x368] sm:$0xf]
    %v282 = vld [vmem:[#allocation2 + $0x36c] sm:$0xf]
    %v283 = vld [vmem:[#allocation2 + $0x370] sm:$0xf]
    %v284 = vld [vmem:[#allocation2 + $0x374] sm:$0xf]
    %v285 = vld [vmem:[#allocation2 + $0x378] sm:$0xf]
    %v286 = vld [vmem:[#allocation2 + $0x37c] sm:$0xf]
    %v287 = vld [vmem:[#allocation2 + $0x380] sm:$0xf]
    %v288 = vld [vmem:[#allocation2 + $0x384] sm:$0xf]
    %v289 = vld [vmem:[#allocation2 + $0x388] sm:$0xf]
    %v290 = vld [vmem:[#allocation2 + $0x38c] sm:$0xf]
    %v291 = vld [vmem:[#allocation2 + $0x390] sm:$0xf]
    %v292 = vld [vmem:[#allocation2 + $0x394] sm:$0xf]
    %v293 = vld [vmem:[#allocation2 + $0x398] sm:$0xf]
    %v294 = vld [vmem:[#allocation2 + $0x39c] sm:$0xf]
    %v295 = vld [vmem:[#allocation2 + $0x3a0] sm:$0xf]
    %v296 = vld [vmem:[#allocation2 + $0x3a4] sm:$0xf]
    %v297 = vld [vmem:[#allocation2 + $0x3a8] sm:$0xf]
    %v298 = vld [vmem:[#allocation2 + $0x3ac] sm:$0xf]
    %v299 = vld [vmem:[#allocation2 + $0x3b0] sm:$0xf]
    %v300 = vld [vmem:[#allocation2 + $0x3b4] sm:$0xf]
    %v301 = vld [vmem:[#allocation2 + $0x3b8] sm:$0xf]
    %v302 = vld [vmem:[#allocation2 + $0x3bc] sm:$0xf]
    %v303 = vld [vmem:[#allocation2 + $0x3c0] sm:$0xf]
    %v304 = vld [vmem:[#allocation2 + $0x3c4] sm:$0xf]
    %v305 = vld [vmem:[#allocation5] sm:$0xff]
    %v306 = vld [vmem:[#allocation5 + $0x8] sm:$0xff]
    %v307 = vld [vmem:[#allocation5 + $0x10] sm:$0xff]
    %v308 = vld [vmem:[#allocation5 + $0x18] sm:$0xff]
    %v309 = vld [vmem:[#allocation5 + $0x20] sm:$0xff]
    %v310 = vld [vmem:[#allocation5 + $0x28] sm:$0xff]
    %v311 = vld [vmem:[#allocation5 + $0x30] sm:$0xff]
    %v312 = vld [vmem:[#allocation5 + $0x38] sm:$0xff]
    %v313 = vld [vmem:[#allocation5 + $0x40] sm:$0xff]
    %v314 = vld [vmem:[#allocation5 + $0x48] sm:$0xff]
    %v315 = vld [vmem:[#allocation5 + $0x50] sm:$0xff]
    %v316 = vld [vmem:[#allocation5 + $0x58] sm:$0xff]
    %v317 = vld [vmem:[#allocation5 + $0x60] sm:$0xff]
    %v318 = vld [vmem:[#allocation5 + $0x68] sm:$0xff]
    %v319 = vld [vmem:[#allocation5 + $0x70] sm:$0xff]
    %v320 = vld [vmem:[#allocation5 + $0x78] sm:$0xff]
    %v321 = vld [vmem:[#allocation5 + $0x80] sm:$0xff]
    %v322 = vld [vmem:[#allocation5 + $0x88] sm:$0xff]
    %v323 = vld [vmem:[#allocation5 + $0x90] sm:$0xff]
    %v324 = vld [vmem:[#allocation5 + $0x98] sm:$0xff]
    %v325 = vld [vmem:[#allocation5 + $0xa0] sm:$0xff]
    %v326 = vld [vmem:[#allocation5 + $0xa8] sm:$0xff]
    %v327 = vld [vmem:[#allocation5 + $0xb0] sm:$0xff]
    %v328 = vld [vmem:[#allocation5 + $0xb8] sm:$0xff]
    %v329 = vld [vmem:[#allocation5 + $0xc0] sm:$0xff]
    %v330 = vld [vmem:[#allocation5 + $0xc8] sm:$0xff]
    %v331 = vld [vmem:[#allocation5 + $0xd0] sm:$0xff]
    %v332 = vld [vmem:[#allocation5 + $0xd8] sm:$0xff]
    %v333 = vld [vmem:[#allocation5 + $0xe0] sm:$0xff]
    %v334 = vld [vmem:[#allocation5 + $0xe8] sm:$0xff]
    %v335 = vld [vmem:[#allocation5 + $0xf0] sm:$0xff]
    %v336 = vld [vmem:[#allocation5 + $0xf8] sm:$0xff]
    %v337 = vld [vmem:[#allocation5 + $0x100] sm:$0xff]
    %v338 = vld [vmem:[#allocation5 + $0x110] sm:$0xff]
    %v339 = vld [vmem:[#allocation5 + $0x120] sm:$0xff]
    %v340 = vld [vmem:[#allocation5 + $0x130] sm:$0xff]
    %v341 = vld [vmem:[#allocation5 + $0x140] sm:$0xff]
    %v342 = vld [vmem:[#allocation5 + $0x150] sm:$0xff]
    %v343 = vld [vmem:[#allocation5 + $0x160] sm:$0xff]
    %v344 = vld [vmem:[#allocation5 + $0x170] sm:$0xff]
    %v345 = vld [vmem:[#allocation5 + $0x180] sm:$0xff]
    %v346 = vld [vmem:[#allocation5 + $0x190] sm:$0xff]
    %v347 = vld [vmem:[#allocation5 + $0x1a0] sm:$0xff]
    %v348 = vld [vmem:[#allocation5 + $0x1b0] sm:$0xff]
    %v349 = vld [vmem:[#allocation5 + $0x1c0] sm:$0xff]
    %v350 = vld [vmem:[#allocation5 + $0x1d0] sm:$0xff]
    %v351 = vld [vmem:[#allocation5 + $0x1e0] sm:$0xff]
    %v352 = vld [vmem:[#allocation5 + $0x1f0] sm:$0xff]
    %v353 = vld [vmem:[#allocation5 + $0x200] sm:$0xff]
    %v354 = vld [vmem:[#allocation5 + $0x210] sm:$0xff]
    %v355 = vld [vmem:[#allocation5 + $0x220] sm:$0xff]
    %v356 = vld [vmem:[#allocation5 + $0x230] sm:$0xff]
    %v357 = vld [vmem:[#allocation5 + $0x240] sm:$0xff]
    %v358 = vld [vmem:[#allocation5 + $0x250] sm:$0xff]
    %v359 = vld [vmem:[#allocation5 + $0x260] sm:$0xff]
    %v360 = vld [vmem:[#allocation5 + $0x270] sm:$0xff]
    %v361 = vld [vmem:[#allocation5 + $0x280] sm:$0xff]
    %v362 = vld [vmem:[#allocation5 + $0x290] sm:$0xff]
    %v363 = vld [vmem:[#allocation5 + $0x2a0] sm:$0xff]
    %v364 = vld [vmem:[#allocation5 + $0x2b0] sm:$0xff]
    %v365 = vld [vmem:[#allocation5 + $0x2c0] sm:$0xff]
    %v366 = vld [vmem:[#allocation5 + $0x2d0] sm:$0xff]
    %v367 = vld [vmem:[#allocation5 + $0x2e0] sm:$0xff]
    %v368 = vld [vmem:[#allocation5 + $0x2f0] sm:$0xff]
    %v369 = vld [vmem:[#allocation5 + $0x300] sm:$0xff]
    %v370 = vld [vmem:[#allocation5 + $0x310] sm:$0xff]
    %v371 = vld [vmem:[#allocation5 + $0x320] sm:$0xff]
    %v372 = vld [vmem:[#allocation5 + $0x330] sm:$0xff]
    %v373 = vld [vmem:[#allocation5 + $0x340] sm:$0xff]
    %v374 = vld [vmem:[#allocation5 + $0x350] sm:$0xff]
    %v375 = vld [vmem:[#allocation5 + $0x360] sm:$0xff]
    %v376 = vld [vmem:[#allocation5 + $0x370] sm:$0xff]
    %v377 = vld [vmem:[#allocation5 + $0x380] sm:$0xff]
    %v378 = vld [vmem:[#allocation5 + $0x390] sm:$0xff]
    %v379 = vld [vmem:[#allocation5 + $0x3a0] sm:$0xff]
    %v380 = vld [vmem:[#allocation5 + $0x3b0] sm:$0xff]
    %v381 = vld [vmem:[#allocation5 + $0x3c0] sm:$0xff]
    %v382 = vld [vmem:[#allocation5 + $0x3d0] sm:$0xff]
    %v383 = vld [vmem:[#allocation5 + $0x3e0] sm:$0xff]
    %v384 = vld [vmem:[#allocation5 + $0x3f0] sm:$0xff]
    %v385 = vld [vmem:[#allocation5 + $0x400] sm:$0xff]
    %v386 = vld [vmem:[#allocation5 + $0x410] sm:$0xff]
    %v387 = vld [vmem:[#allocation5 + $0x420] sm:$0xff]
    %v388 = vld [vmem:[#allocation5 + $0x430] sm:$0xff]
    %v389 = vld [vmem:[#allocation5 + $0x440] sm:$0xff]
    %v390 = vld [vmem:[#allocation5 + $0x450] sm:$0xff]
    %v391 = vld [vmem:[#allocation5 + $0x460] sm:$0xff]
    %v392 = vld [vmem:[#allocation5 + $0x470] sm:$0xff]
    %v393 = vld [vmem:[#allocation5 + $0x480] sm:$0xff]
    %v394 = vld [vmem:[#allocation5 + $0x490] sm:$0xff]
    %v395 = vld [vmem:[#allocation5 + $0x4a0] sm:$0xff]
    %v396 = vld [vmem:[#allocation5 + $0x4b0] sm:$0xff]
    %v397 = vld [vmem:[#allocation5 + $0x4c0] sm:$0xff]
    %v398 = vld [vmem:[#allocation5 + $0x4d0] sm:$0xff]
    %v399 = vld [vmem:[#allocation5 + $0x4e0] sm:$0xff]
    %v400 = vld [vmem:[#allocation5 + $0x4f0] sm:$0xff]
    %v401 = vld [vmem:[%s0] sm:$0xff]
    %v402 = vld [vmem:[%s0 + $0x8] sm:$0xff]
    %v403 = vld [vmem:[%s0 + $0x10] sm:$0xff]
    %v404 = vld [vmem:[%s0 + $0x18] sm:$0xff]
    %v405 = vld [vmem:[%s0 + $0x20] sm:$0xff]
    %v406 = vld [vmem:[%s0 + $0x28] sm:$0xff]
    %v407 = vld [vmem:[%s0 + $0x30] sm:$0xff]
    %v408 = vld [vmem:[%s0 + $0x38] sm:$0xff]
    %410 = vset.pattern.permute.xlu0 0
    %411 = vperm.xlu0 %410, %v401
    %v412 = vpop.permute.xlu0 %411
    %415 = vset.pattern.permute.xlu0 0
    %416 = vperm.xlu0 %415, %v402
    %v417 = vpop.permute.xlu0 %416
    %420 = vset.pattern.permute.xlu0 0
    %421 = vperm.xlu0 %420, %v403
    %v422 = vpop.permute.xlu0 %421
    %425 = vset.pattern.permute.xlu0 0
    %426 = vperm.xlu0 %425, %v404
    %v427 = vpop.permute.xlu0 %426
    %430 = vset.pattern.permute.xlu0 0
    %431 = vperm.xlu0 %430, %v405
    %v432 = vpop.permute.xlu0 %431
    %435 = vset.pattern.permute.xlu0 0
    %436 = vperm.xlu0 %435, %v406
    %v437 = vpop.permute.xlu0 %436
    %440 = vset.pattern.permute.xlu0 0
    %441 = vperm.xlu0 %440, %v407
    %v442 = vpop.permute.xlu0 %441
    %445 = vset.pattern.permute.xlu0 0
    %446 = vperm.xlu0 %445, %v408
    %v447 = vpop.permute.xlu0 %446
    %v449 = vlaneseq
    %v450 = vshrl.u32 %v449, 7
    %v451 = vsub.s32 4, %v450
    %v452 = vrot.slane %v62, %v451
    %v453 = vmul.f32 %v412, %v452
    %v454 = vmul.f32 %v417, %v452
    %v455 = vmul.f32 %v422, %v452
    %v456 = vmul.f32 %v427, %v452
    %v457 = vmul.f32 %v432, %v452
    %v458 = vmul.f32 %v437, %v452
    %v459 = vmul.f32 %v442, %v452
    %v460 = vmul.f32 %v447, %v452
    %v461 = vadd.f32 %v50, %v453
    %v462 = vadd.f32 %v50, %v454
    %v463 = vadd.f32 %v50, %v455
    %v464 = vadd.f32 %v50, %v456
    %v465 = vadd.f32 %v50, %v457
    %v466 = vadd.f32 %v50, %v458
    %v467 = vadd.f32 %v50, %v459
    %v468 = vadd.f32 %v50, %v460
    %469 = vset.pattern.permute.xlu0 1
    %470 = vperm.xlu0 %469, %v401
    %v471 = vpop.permute.xlu0 %470
    %473 = vset.pattern.permute.xlu0 1
    %474 = vperm.xlu0 %473, %v402
    %v475 = vpop.permute.xlu0 %474
    %477 = vset.pattern.permute.xlu0 1
    %478 = vperm.xlu0 %477, %v403
    %v479 = vpop.permute.xlu0 %478
    %481 = vset.pattern.permute.xlu0 1
    %482 = vperm.xlu0 %481, %v404
    %v483 = vpop.permute.xlu0 %482
    %485 = vset.pattern.permute.xlu0 1
    %486 = vperm.xlu0 %485, %v405
    %v487 = vpop.permute.xlu0 %486
    %489 = vset.pattern.permute.xlu0 1
    %490 = vperm.xlu0 %489, %v406
    %v491 = vpop.permute.xlu0 %490
    %493 = vset.pattern.permute.xlu0 1
    %494 = vperm.xlu0 %493, %v407
    %v495 = vpop.permute.xlu0 %494
    %497 = vset.pattern.permute.xlu0 1
    %498 = vperm.xlu0 %497, %v408
    %v499 = vpop.permute.xlu0 %498
    %v501 = vlaneseq
    %v502 = vshrl.u32 %v501, 7
    %v503 = vsub.s32 5, %v502
    %v504 = vrot.slane %v62, %v503
    %v505 = vmul.f32 %v471, %v504
    %v506 = vmul.f32 %v475, %v504
    %v507 = vmul.f32 %v479, %v504
    %v508 = vmul.f32 %v483, %v504
    %v509 = vmul.f32 %v487, %v504
    %v510 = vmul.f32 %v491, %v504
    %v511 = vmul.f32 %v495, %v504
    %v512 = vmul.f32 %v499, %v504
    %v513 = vadd.f32 %v461, %v505
    %v514 = vadd.f32 %v462, %v506
    %v515 = vadd.f32 %v463, %v507
    %v516 = vadd.f32 %v464, %v508
    %v517 = vadd.f32 %v465, %v509
    %v518 = vadd.f32 %v466, %v510
    %v519 = vadd.f32 %v467, %v511
    %v520 = vadd.f32 %v468, %v512
    %521 = vset.pattern.permute.xlu0 2
    %522 = vperm.xlu0 %521, %v401
    %v523 = vpop.permute.xlu0 %522
    %525 = vset.pattern.permute.xlu0 2
    %526 = vperm.xlu0 %525, %v402
    %v527 = vpop.permute.xlu0 %526
    %529 = vset.pattern.permute.xlu0 2
    %530 = vperm.xlu0 %529, %v403
    %v531 = vpop.permute.xlu0 %530
    %533 = vset.pattern.permute.xlu0 2
    %534 = vperm.xlu0 %533, %v404
    %v535 = vpop.permute.xlu0 %534
    %537 = vset.pattern.permute.xlu0 2
    %538 = vperm.xlu0 %537, %v405
    %v539 = vpop.permute.xlu0 %538
    %541 = vset.pattern.permute.xlu0 2
    %542 = vperm.xlu0 %541, %v406
    %v543 = vpop.permute.xlu0 %542
    %545 = vset.pattern.permute.xlu0 2
    %546 = vperm.xlu0 %545, %v407
    %v547 = vpop.permute.xlu0 %546
    %549 = vset.pattern.permute.xlu0 2
    %550 = vperm.xlu0 %549, %v408
    %v551 = vpop.permute.xlu0 %550
    %v553 = vlaneseq
    %v554 = vshrl.u32 %v553, 7
    %v555 = vsub.s32 6, %v554
    %v556 = vrot.slane %v62, %v555
    %v557 = vmul.f32 %v523, %v556
    %v558 = vmul.f32 %v527, %v556
    %v559 = vmul.f32 %v531, %v556
    %v560 = vmul.f32 %v535, %v556
    %v561 = vmul.f32 %v539, %v556
    %v562 = vmul.f32 %v543, %v556
    %v563 = vmul.f32 %v547, %v556
    %v564 = vmul.f32 %v551, %v556
    %v565 = vadd.f32 %v513, %v557
    %v566 = vadd.f32 %v514, %v558
    %v567 = vadd.f32 %v515, %v559
    %v568 = vadd.f32 %v516, %v560
    %v569 = vadd.f32 %v517, %v561
    %v570 = vadd.f32 %v518, %v562
    %v571 = vadd.f32 %v519, %v563
    %v572 = vadd.f32 %v520, %v564
    %573 = vset.pattern.permute.xlu0 3
    %574 = vperm.xlu0 %573, %v401
    %v575 = vpop.permute.xlu0 %574
    %577 = vset.pattern.permute.xlu0 3
    %578 = vperm.xlu0 %577, %v402
    %v579 = vpop.permute.xlu0 %578
    %581 = vset.pattern.permute.xlu0 3
    %582 = vperm.xlu0 %581, %v403
    %v583 = vpop.permute.xlu0 %582
    %585 = vset.pattern.permute.xlu0 3
    %586 = vperm.xlu0 %585, %v404
    %v587 = vpop.permute.xlu0 %586
    %589 = vset.pattern.permute.xlu0 3
    %590 = vperm.xlu0 %589, %v405
    %v591 = vpop.permute.xlu0 %590
    %593 = vset.pattern.permute.xlu0 3
    %594 = vperm.xlu0 %593, %v406
    %v595 = vpop.permute.xlu0 %594
    %597 = vset.pattern.permute.xlu0 3
    %598 = vperm.xlu0 %597, %v407
    %v599 = vpop.permute.xlu0 %598
    %601 = vset.pattern.permute.xlu0 3
    %602 = vperm.xlu0 %601, %v408
    %v603 = vpop.permute.xlu0 %602
    %v605 = vlaneseq
    %v606 = vshrl.u32 %v605, 7
    %v607 = vsub.s32 7, %v606
    %v608 = vrot.slane %v62, %v607
    %v609 = vmul.f32 %v575, %v608
    %v610 = vmul.f32 %v579, %v608
    %v611 = vmul.f32 %v583, %v608
    %v612 = vmul.f32 %v587, %v608
    %v613 = vmul.f32 %v591, %v608
    %v614 = vmul.f32 %v595, %v608
    %v615 = vmul.f32 %v599, %v608
    %v616 = vmul.f32 %v603, %v608
    %v617 = vadd.f32 %v565, %v609
    %v618 = vadd.f32 %v566, %v610
    %v619 = vadd.f32 %v567, %v611
    %v620 = vadd.f32 %v568, %v612
    %v621 = vadd.f32 %v569, %v613
    %v622 = vadd.f32 %v570, %v614
    %v623 = vadd.f32 %v571, %v615
    %v624 = vadd.f32 %v572, %v616
    %v625 = vmax.f32 %v617, 0.0
    %v626 = vmax.f32 %v618, 0.0
    %v627 = vmax.f32 %v619, 0.0
    %v628 = vmax.f32 %v620, 0.0
    %v629 = vmax.f32 %v621, 0.0
    %v630 = vmax.f32 %v622, 0.0
    %v631 = vmax.f32 %v623, 0.0
    %v632 = vmax.f32 %v624, 0.0
    %v633 = vpack.c.bf16 %v626, %v625
    %v634 = vpack.c.bf16 %v628, %v627
    %v635 = vpack.c.bf16 %v630, %v629
    %v636 = vpack.c.bf16 %v632, %v631
    %v653 = vunpack.c.l.b16 %v63
    %v654 = vunpack.c.l.b16 %v64
    %v655 = vunpack.c.l.b16 %v65
    %v656 = vunpack.c.l.b16 %v66
    %v657 = vunpack.c.l.b16 %v67
    %v658 = vunpack.c.l.b16 %v68
    %v659 = vunpack.c.l.b16 %v69
    %v660 = vunpack.c.l.b16 %v70
    %v661 = vunpack.c.l.b16 %v71
    %v662 = vunpack.c.l.b16 %v72
    %v663 = vunpack.c.l.b16 %v73
    %v664 = vunpack.c.l.b16 %v74
    %v665 = vunpack.c.l.b16 %v75
    %v666 = vunpack.c.l.b16 %v76
    %v667 = vunpack.c.l.b16 %v77
    %v668 = vunpack.c.l.b16 %v78
    %v669 = vpack.c.b16 %v654, %v653
    %v670 = vpack.c.b16 %v656, %v655
    %v671 = vpack.c.b16 %v658, %v657
    %v672 = vpack.c.b16 %v660, %v659
    %v673 = vpack.c.b16 %v662, %v661
    %v674 = vpack.c.b16 %v664, %v663
    %v675 = vpack.c.b16 %v666, %v665
    %v676 = vpack.c.b16 %v668, %v667
    %685 = vmatprep.subr.bf16.mxu0 0
    %686 = vmatpush1.bf16.msra.mxu0 %v669
    %687 = vmatprep.subr.bf16.mxu0 0
    %688 = vmatpush1.bf16.msra.mxu0 %v670
    %689 = vmatprep.subr.bf16.mxu0 0
    %690 = vmatpush1.bf16.msra.mxu0 %v671
    %691 = vmatprep.subr.bf16.mxu0 0
    %692 = vmatpush1.bf16.msra.mxu0 %v672
    %693 = vmatprep.subr.bf16.mxu0 0
    %694 = vmatpush1.bf16.msra.mxu0 %v673
    %695 = vmatprep.subr.bf16.mxu0 0
    %696 = vmatpush1.bf16.msra.mxu0 %v674
    %697 = vmatprep.subr.bf16.mxu0 0
    %698 = vmatpush1.bf16.msra.mxu0 %v675
    %699 = vmatprep.subr.bf16.mxu0 0
    %700 = vmatpush1.bf16.msra.mxu0 %v676
    %701 = vmatprep.subr.bf16.mxu0 0
    %702 = vmatpush1.bf16.msra.mxu0 0
    %703 = vmatprep.subr.bf16.mxu0 0
    %704 = vmatpush1.bf16.msra.mxu0 0
    %705 = vmatprep.subr.bf16.mxu0 0
    %706 = vmatpush1.bf16.msra.mxu0 0
    %707 = vmatprep.subr.bf16.mxu0 0
    %708 = vmatpush1.bf16.msra.mxu0 0
    %709 = vmatprep.subr.bf16.mxu0 0
    %710 = vmatpush1.bf16.msra.mxu0 0
    %711 = vmatprep.subr.bf16.mxu0 0
    %712 = vmatpush1.bf16.msra.mxu0 0
    %713 = vmatprep.subr.bf16.mxu0 0
    %714 = vmatpush1.bf16.msra.mxu0 0
    %715 = vmatprep.subr.bf16.mxu0 0
    %716 = vmatpush1.bf16.msra.mxu0 0
    %717 = vmatprep.mubr.bf16.mxu0 0
    %718 = vmatmul.mubr.bf16.gmra.mrb[0].mxu0 %v633
    %v719 = vpop.f32.mrb[0].mxu0
    %v720 = vadd.f32 %v51, %v719
    %v721 = vpop.f32.mrb[0].mxu0
    %v722 = vpop.f32.mrb[0].mxu0
    %v723 = vadd.f32 %v51, %v722
    %v724 = vpop.f32.mrb[0].mxu0
    %725 = vmatprep.mubr.bf16.mxu0 0
    %726 = vmatmul.mubr.bf16.gmra.mrb[0].mxu0 %v634
    %v727 = vpop.f32.mrb[0].mxu0
    %v728 = vadd.f32 %v51, %v727
    %v729 = vpop.f32.mrb[0].mxu0
    %v730 = vpop.f32.mrb[0].mxu0
    %v731 = vadd.f32 %v51, %v730
    %v732 = vpop.f32.mrb[0].mxu0
    %733 = vmatprep.mubr.bf16.mxu0 0
    %734 = vmatmul.mubr.bf16.gmra.mrb[0].mxu0 %v635
    %v735 = vpop.f32.mrb[0].mxu0
    %v736 = vadd.f32 %v51, %v735
    %v737 = vpop.f32.mrb[0].mxu0
    %v738 = vpop.f32.mrb[0].mxu0
    %v739 = vadd.f32 %v51, %v738
    %v740 = vpop.f32.mrb[0].mxu0
    %741 = vmatprep.mubr.bf16.mxu0 0
    %742 = vmatmul.mubr.bf16.gmra.mrb[0].mxu0 %v636
    %v743 = vpop.f32.mrb[0].mxu0
    %v744 = vadd.f32 %v51, %v743
    %v745 = vpop.f32.mrb[0].mxu0
    %v746 = vpop.f32.mrb[0].mxu0
    %v747 = vadd.f32 %v51, %v746
    %v748 = vpop.f32.mrb[0].mxu0
    %749 = vdwg.mxu0
    %v750 = vmax.f32 %v720, 0.0
    %v751 = vmax.f32 %v723, 0.0
    %v752 = vmax.f32 %v728, 0.0
    %v753 = vmax.f32 %v731, 0.0
    %v754 = vmax.f32 %v736, 0.0
    %v755 = vmax.f32 %v739, 0.0
    %v756 = vmax.f32 %v744, 0.0
    %v757 = vmax.f32 %v747, 0.0
    %v758 = vpack.c.bf16 %v751, %v750
    %v759 = vpack.c.bf16 %v753, %v752
    %v760 = vpack.c.bf16 %v755, %v754
    %v761 = vpack.c.bf16 %v757, %v756
    %v762 = vld [vmem:[%s1] sm:$0xf]
    %v763 = vld [vmem:[%s1 + $0x4] sm:$0xf]
    %v764 = vld [vmem:[%s1 + $0x8] sm:$0xf]
    %v765 = vld [vmem:[%s1 + $0xc] sm:$0xf]
    %v766 = vld [vmem:[%s1 + $0x10] sm:$0xf]
    %v767 = vld [vmem:[%s1 + $0x14] sm:$0xf]
    %v768 = vld [vmem:[%s1 + $0x18] sm:$0xf]
    %v769 = vld [vmem:[%s1 + $0x1c] sm:$0xf]
    %v778 = vunpack.c.l.b16 %v762
    %v779 = vunpack.c.l.b16 %v763
    %v780 = vunpack.c.l.b16 %v764
    %v781 = vunpack.c.l.b16 %v765
    %v782 = vunpack.c.l.b16 %v766
    %v783 = vunpack.c.l.b16 %v767
    %v784 = vunpack.c.l.b16 %v768
    %v785 = vunpack.c.l.b16 %v769
    %v786 = vpack.c.b16 %v779, %v778
    %v787 = vpack.c.b16 %v781, %v780
    %v788 = vpack.c.b16 %v783, %v782
    %v789 = vpack.c.b16 %v785, %v784
    %v792 = vunpack.c.l.b16 %v95
    %v793 = vunpack.c.l.b16 %v96
    %v794 = vpack.c.b16 %v793, %v792
    %vm796 = vcmask 130048
    %v798 = vsel %vm796, %v786, 0
    %v801 = vsel %vm796, %v787, 0
    %v804 = vsel %vm796, %v788, 0
    %v807 = vsel %vm796, %v789, 0
    %809 = vmatprep.subr.bf16.mxu0 0
    %810 = vmatpush1.bf16.msra.mxu0 %v794
    %811 = vmatprep.subr.bf16.mxu0 0
    %812 = vmatpush1.bf16.msra.mxu0 0
    %813 = vmatprep.subr.bf16.mxu0 0
    %814 = vmatpush1.bf16.msra.mxu0 0
    %815 = vmatprep.subr.bf16.mxu0 0
    %816 = vmatpush1.bf16.msra.mxu0 0
    %817 = vmatprep.subr.bf16.mxu0 0
    %818 = vmatpush1.bf16.msra.mxu0 0
    %819 = vmatprep.subr.bf16.mxu0 0
    %820 = vmatpush1.bf16.msra.mxu0 0
    %821 = vmatprep.subr.bf16.mxu0 0
    %822 = vmatpush1.bf16.msra.mxu0 0
    %823 = vmatprep.subr.bf16.mxu0 0
    %824 = vmatpush1.bf16.msra.mxu0 0
    %825 = vmatprep.subr.bf16.mxu0 0
    %826 = vmatpush1.bf16.msra.mxu0 0
    %827 = vmatprep.subr.bf16.mxu0 0
    %828 = vmatpush1.bf16.msra.mxu0 0
    %829 = vmatprep.subr.bf16.mxu0 0
    %830 = vmatpush1.bf16.msra.mxu0 0
    %831 = vmatprep.subr.bf16.mxu0 0
    %832 = vmatpush1.bf16.msra.mxu0 0
    %833 = vmatprep.subr.bf16.mxu0 0
    %834 = vmatpush1.bf16.msra.mxu0 0
    %835 = vmatprep.subr.bf16.mxu0 0
    %836 = vmatpush1.bf16.msra.mxu0 0
    %837 = vmatprep.subr.bf16.mxu0 0
    %838 = vmatpush1.bf16.msra.mxu0 0
    %839 = vmatprep.subr.bf16.mxu0 0
    %840 = vmatpush1.bf16.msra.mxu0 0
    %841 = vmatprep.mubr.bf16.mxu0 0
    %842 = vmatmul.mubr.bf16.gmra.mrb[0].mxu0 %v798
    %v843 = vpop.f32.mrb[0].mxu0
    %v844 = vadd.f32 0.0, %v843
    %v845 = vpop.f32.mrb[0].mxu0
    %v846 = vpop.f32.mrb[0].mxu0
    %v847 = vadd.f32 0.0, %v846
    %v848 = vpop.f32.mrb[0].mxu0
    %849 = vmatprep.mubr.bf16.mxu0 0
    %850 = vmatmul.mubr.bf16.gmra.mrb[0].mxu0 %v801
    %v851 = vpop.f32.mrb[0].mxu0
    %v852 = vadd.f32 0.0, %v851
    %v853 = vpop.f32.mrb[0].mxu0
    %v854 = vpop.f32.mrb[0].mxu0
    %v855 = vadd.f32 0.0, %v854
    %v856 = vpop.f32.mrb[0].mxu0
    %857 = vmatprep.mubr.bf16.mxu0 0
    %858 = vmatmul.mubr.bf16.gmra.mrb[0].mxu0 %v804
    %v859 = vpop.f32.mrb[0].mxu0
    %v860 = vadd.f32 0.0, %v859
    %v861 = vpop.f32.mrb[0].mxu0
    %v862 = vpop.f32.mrb[0].mxu0
    %v863 = vadd.f32 0.0, %v862
    %v864 = vpop.f32.mrb[0].mxu0
    %865 = vmatprep.mubr.bf16.mxu0 0
    %866 = vmatmul.mubr.bf16.gmra.mrb[0].mxu0 %v807
    %v867 = vpop.f32.mrb[0].mxu0
    %v868 = vadd.f32 0.0, %v867
    %v869 = vpop.f32.mrb[0].mxu0
    %v870 = vpop.f32.mrb[0].mxu0
    %v871 = vadd.f32 0.0, %v870
    %v872 = vpop.f32.mrb[0].mxu0
    %873 = vdwg.mxu0
    %v890 = vunpack.c.l.b16 %v79
    %v891 = vunpack.c.l.b16 %v80
    %v892 = vunpack.c.l.b16 %v81
    %v893 = vunpack.c.l.b16 %v82
    %v894 = vunpack.c.l.b16 %v83
    %v895 = vunpack.c.l.b16 %v84
    %v896 = vunpack.c.l.b16 %v85
    %v897 = vunpack.c.l.b16 %v86
    %v898 = vunpack.c.l.b16 %v87
    %v899 = vunpack.c.l.b16 %v88
    %v900 = vunpack.c.l.b16 %v89
    %v901 = vunpack.c.l.b16 %v90
    %v902 = vunpack.c.l.b16 %v91
    %v903 = vunpack.c.l.b16 %v92
    %v904 = vunpack.c.l.b16 %v93
    %v905 = vunpack.c.l.b16 %v94
    %v906 = vpack.c.b16 %v891, %v890
    %v907 = vpack.c.b16 %v893, %v892
    %v908 = vpack.c.b16 %v895, %v894
    %v909 = vpack.c.b16 %v897, %v896
    %v910 = vpack.c.b16 %v899, %v898
    %v911 = vpack.c.b16 %v901, %v900
    %v912 = vpack.c.b16 %v903, %v902
    %v913 = vpack.c.b16 %v905, %v904
    %922 = vmatprep.subr.bf16.mxu0 0
    %923 = vmatpush1.bf16.msra.mxu0 %v906
    %924 = vmatprep.subr.bf16.mxu0 0
    %925 = vmatpush1.bf16.msra.mxu0 %v907
    %926 = vmatprep.subr.bf16.mxu0 0
    %927 = vmatpush1.bf16.msra.mxu0 %v908
    %928 = vmatprep.subr.bf16.mxu0 0
    %929 = vmatpush1.bf16.msra.mxu0 %v909
    %930 = vmatprep.subr.bf16.mxu0 0
    %931 = vmatpush1.bf16.msra.mxu0 %v910
    %932 = vmatprep.subr.bf16.mxu0 0
    %933 = vmatpush1.bf16.msra.mxu0 %v911
    %934 = vmatprep.subr.bf16.mxu0 0
    %935 = vmatpush1.bf16.msra.mxu0 %v912
    %936 = vmatprep.subr.bf16.mxu0 0
    %937 = vmatpush1.bf16.msra.mxu0 %v913
    %938 = vmatprep.subr.bf16.mxu0 0
    %939 = vmatpush1.bf16.msra.mxu0 0
    %940 = vmatprep.subr.bf16.mxu0 0
    %941 = vmatpush1.bf16.msra.mxu0 0
    %942 = vmatprep.subr.bf16.mxu0 0
    %943 = vmatpush1.bf16.msra.mxu0 0
    %944 = vmatprep.subr.bf16.mxu0 0
    %945 = vmatpush1.bf16.msra.mxu0 0
    %946 = vmatprep.subr.bf16.mxu0 0
    %947 = vmatpush1.bf16.msra.mxu0 0
    %948 = vmatprep.subr.bf16.mxu0 0
    %949 = vmatpush1.bf16.msra.mxu0 0
    %950 = vmatprep.subr.bf16.mxu0 0
    %951 = vmatpush1.bf16.msra.mxu0 0
    %952 = vmatprep.subr.bf16.mxu0 0
    %953 = vmatpush1.bf16.msra.mxu0 0
    %954 = vmatprep.mubr.bf16.mxu0 0
    %955 = vmatmul.mubr.bf16.gmra.mrb[0].mxu0 %v758
    %v956 = vpop.f32.mrb[0].mxu0
    %v957 = vadd.f32 %v844, %v956
    %v958 = vpop.f32.mrb[0].mxu0
    %v959 = vpop.f32.mrb[0].mxu0
    %v960 = vadd.f32 %v847, %v959
    %v961 = vpop.f32.mrb[0].mxu0
    %962 = vmatprep.mubr.bf16.mxu0 0
    %963 = vmatmul.mubr.bf16.gmra.mrb[0].mxu0 %v759
    %v964 = vpop.f32.mrb[0].mxu0
    %v965 = vadd.f32 %v852, %v964
    %v966 = vpop.f32.mrb[0].mxu0
    %v967 = vpop.f32.mrb[0].mxu0
    %v968 = vadd.f32 %v855, %v967
    %v969 = vpop.f32.mrb[0].mxu0
    %970 = vmatprep.mubr.bf16.mxu0 0
    %971 = vmatmul.mubr.bf16.gmra.mrb[0].mxu0 %v760
    %v972 = vpop.f32.mrb[0].mxu0
    %v973 = vadd.f32 %v860, %v972
    %v974 = vpop.f32.mrb[0].mxu0
    %v975 = vpop.f32.mrb[0].mxu0
    %v976 = vadd.f32 %v863, %v975
    %v977 = vpop.f32.mrb[0].mxu0
    %978 = vmatprep.mubr.bf16.mxu0 0
    %979 = vmatmul.mubr.bf16.gmra.mrb[0].mxu0 %v761
    %v980 = vpop.f32.mrb[0].mxu0
    %v981 = vadd.f32 %v868, %v980
    %v982 = vpop.f32.mrb[0].mxu0
    %v983 = vpop.f32.mrb[0].mxu0
    %v984 = vadd.f32 %v871, %v983
    %v985 = vpop.f32.mrb[0].mxu0
    %986 = vdwg.mxu0
    %v987 = vadd.f32 %v957, %v52
    %v988 = vadd.f32 %v960, %v52
    %v989 = vadd.f32 %v965, %v52
    %v990 = vadd.f32 %v968, %v52
    %v991 = vadd.f32 %v973, %v52
    %v992 = vadd.f32 %v976, %v52
    %v993 = vadd.f32 %v981, %v52
    %v994 = vadd.f32 %v984, %v52
    %v995 = vmax.f32 %v987, 0.0
    %v996 = vmax.f32 %v988, 0.0
    %v997 = vmax.f32 %v989, 0.0
    %v998 = vmax.f32 %v990, 0.0
    %v999 = vmax.f32 %v991, 0.0
    %v1000 = vmax.f32 %v992, 0.0
    %v1001 = vmax.f32 %v993, 0.0
    %v1002 = vmax.f32 %v994, 0.0
    %v1003 = vadd.f32 %v995, %v996
    %v1004 = vadd.f32 %v1003, %v997
    %v1005 = vadd.f32 %v1004, %v998
    %v1006 = vadd.f32 %v999, %v1000
    %v1007 = vadd.f32 %v1006, %v1001
    %v1008 = vadd.f32 %v1007, %v1002
    %v1009 = vsub.f32 %v1005, %v995
    %v1010 = vsub.f32 %v1005, %v996
    %v1011 = vsub.f32 %v1005, %v997
    %v1012 = vsub.f32 %v1005, %v998
    %v1013 = vsub.f32 %v1008, %v999
    %v1014 = vsub.f32 %v1008, %v1000
    %v1015 = vsub.f32 %v1008, %v1001
    %v1016 = vsub.f32 %v1008, %v1002
    %v1017 = vmul.f32 %v1009, 0.33333334
    %v1018 = vmul.f32 %v1010, 0.33333334
    %v1019 = vmul.f32 %v1011, 0.33333334
    %v1020 = vmul.f32 %v1012, 0.33333334
    %v1021 = vmul.f32 %v1013, 0.33333334
    %v1022 = vmul.f32 %v1014, 0.33333334
    %v1023 = vmul.f32 %v1015, 0.33333334
    %v1024 = vmul.f32 %v1016, 0.33333334
    %v1025 = vpack.c.bf16 %v996, %v995
    %v1026 = vpack.c.bf16 %v998, %v997
    %v1027 = vpack.c.bf16 %v1000, %v999
    %v1028 = vpack.c.bf16 %v1002, %v1001
    %v1029 = vpack.c.bf16 %v1018, %v1017
    %v1030 = vpack.c.bf16 %v1020, %v1019
    %v1031 = vpack.c.bf16 %v1022, %v1021
    %v1032 = vpack.c.bf16 %v1024, %v1023
    %v1049 = vunpack.c.l.b16 %v113
    %v1050 = vunpack.c.l.b16 %v114
    %v1051 = vunpack.c.l.b16 %v115
    %v1052 = vunpack.c.l.b16 %v116
    %v1053 = vunpack.c.l.b16 %v117
    %v1054 = vunpack.c.l.b16 %v118
    %v1055 = vunpack.c.l.b16 %v119
    %v1056 = vunpack.c.l.b16 %v120
    %v1057 = vunpack.c.l.b16 %v121
    %v1058 = vunpack.c.l.b16 %v122
    %v1059 = vunpack.c.l.b16 %v123
    %v1060 = vunpack.c.l.b16 %v124
    %v1061 = vunpack.c.l.b16 %v125
    %v1062 = vunpack.c.l.b16 %v126
    %v1063 = vunpack.c.l.b16 %v127
    %v1064 = vunpack.c.l.b16 %v128
    %v1065 = vpack.c.b16 %v1050, %v1049
    %v1066 = vpack.c.b16 %v1052, %v1051
    %v1067 = vpack.c.b16 %v1054, %v1053
    %v1068 = vpack.c.b16 %v1056, %v1055
    %v1069 = vpack.c.b16 %v1058, %v1057
    %v1070 = vpack.c.b16 %v1060, %v1059
    %v1071 = vpack.c.b16 %v1062, %v1061
    %v1072 = vpack.c.b16 %v1064, %v1063
    %1081 = vmatprep.subr.bf16.mxu0 0
    %1082 = vmatpush1.bf16.msra.mxu0 %v1065
    %1083 = vmatprep.subr.bf16.mxu0 0
    %1084 = vmatpush1.bf16.msra.mxu0 %v1066
    %1085 = vmatprep.subr.bf16.mxu0 0
    %1086 = vmatpush1.bf16.msra.mxu0 %v1067
    %1087 = vmatprep.subr.bf16.mxu0 0
    %1088 = vmatpush1.bf16.msra.mxu0 %v1068
    %1089 = vmatprep.subr.bf16.mxu0 0
    %1090 = vmatpush1.bf16.msra.mxu0 %v1069
    %1091 = vmatprep.subr.bf16.mxu0 0
    %1092 = vmatpush1.bf16.msra.mxu0 %v1070
    %1093 = vmatprep.subr.bf16.mxu0 0
    %1094 = vmatpush1.bf16.msra.mxu0 %v1071
    %1095 = vmatprep.subr.bf16.mxu0 0
    %1096 = vmatpush1.bf16.msra.mxu0 %v1072
    %1097 = vmatprep.subr.bf16.mxu0 0
    %1098 = vmatpush1.bf16.msra.mxu0 0
    %1099 = vmatprep.subr.bf16.mxu0 0
    %1100 = vmatpush1.bf16.msra.mxu0 0
    %1101 = vmatprep.subr.bf16.mxu0 0
    %1102 = vmatpush1.bf16.msra.mxu0 0
    %1103 = vmatprep.subr.bf16.mxu0 0
    %1104 = vmatpush1.bf16.msra.mxu0 0
    %1105 = vmatprep.subr.bf16.mxu0 0
    %1106 = vmatpush1.bf16.msra.mxu0 0
    %1107 = vmatprep.subr.bf16.mxu0 0
    %1108 = vmatpush1.bf16.msra.mxu0 0
    %1109 = vmatprep.subr.bf16.mxu0 0
    %1110 = vmatpush1.bf16.msra.mxu0 0
    %1111 = vmatprep.subr.bf16.mxu0 0
    %1112 = vmatpush1.bf16.msra.mxu0 0
    %1113 = vmatprep.mubr.bf16.mxu0 0
    %1114 = vmatmul.mubr.bf16.gmra.mrb[0].mxu0 %v1029
    %v1115 = vpop.f32.mrb[0].mxu0
    %v1116 = vadd.f32 0.0, %v1115
    %v1117 = vpop.f32.mrb[0].mxu0
    %v1118 = vpop.f32.mrb[0].mxu0
    %v1119 = vadd.f32 0.0, %v1118
    %v1120 = vpop.f32.mrb[0].mxu0
    %1121 = vmatprep.mubr.bf16.mxu0 0
    %1122 = vmatmul.mubr.bf16.gmra.mrb[0].mxu0 %v1030
    %v1123 = vpop.f32.mrb[0].mxu0
    %v1124 = vadd.f32 0.0, %v1123
    %v1125 = vpop.f32.mrb[0].mxu0
    %v1126 = vpop.f32.mrb[0].mxu0
    %v1127 = vadd.f32 0.0, %v1126
    %v1128 = vpop.f32.mrb[0].mxu0
    %1129 = vmatprep.mubr.bf16.mxu0 0
    %1130 = vmatmul.mubr.bf16.gmra.mrb[0].mxu0 %v1031
    %v1131 = vpop.f32.mrb[0].mxu0
    %v1132 = vadd.f32 0.0, %v1131
    %v1133 = vpop.f32.mrb[0].mxu0
    %v1134 = vpop.f32.mrb[0].mxu0
    %v1135 = vadd.f32 0.0, %v1134
    %v1136 = vpop.f32.mrb[0].mxu0
    %1137 = vmatprep.mubr.bf16.mxu0 0
    %1138 = vmatmul.mubr.bf16.gmra.mrb[0].mxu0 %v1032
    %v1139 = vpop.f32.mrb[0].mxu0
    %v1140 = vadd.f32 0.0, %v1139
    %v1141 = vpop.f32.mrb[0].mxu0
    %v1142 = vpop.f32.mrb[0].mxu0
    %v1143 = vadd.f32 0.0, %v1142
    %v1144 = vpop.f32.mrb[0].mxu0
    %1145 = vdwg.mxu0
    %v1162 = vunpack.c.l.b16 %v97
    %v1163 = vunpack.c.l.b16 %v98
    %v1164 = vunpack.c.l.b16 %v99
    %v1165 = vunpack.c.l.b16 %v100
    %v1166 = vunpack.c.l.b16 %v101
    %v1167 = vunpack.c.l.b16 %v102
    %v1168 = vunpack.c.l.b16 %v103
    %v1169 = vunpack.c.l.b16 %v104
    %v1170 = vunpack.c.l.b16 %v105
    %v1171 = vunpack.c.l.b16 %v106
    %v1172 = vunpack.c.l.b16 %v107
    %v1173 = vunpack.c.l.b16 %v108
    %v1174 = vunpack.c.l.b16 %v109
    %v1175 = vunpack.c.l.b16 %v110
    %v1176 = vunpack.c.l.b16 %v111
    %v1177 = vunpack.c.l.b16 %v112
    %v1178 = vpack.c.b16 %v1163, %v1162
    %v1179 = vpack.c.b16 %v1165, %v1164
    %v1180 = vpack.c.b16 %v1167, %v1166
    %v1181 = vpack.c.b16 %v1169, %v1168
    %v1182 = vpack.c.b16 %v1171, %v1170
    %v1183 = vpack.c.b16 %v1173, %v1172
    %v1184 = vpack.c.b16 %v1175, %v1174
    %v1185 = vpack.c.b16 %v1177, %v1176
    %1194 = vmatprep.subr.bf16.mxu0 0
    %1195 = vmatpush1.bf16.msra.mxu0 %v1178
    %1196 = vmatprep.subr.bf16.mxu0 0
    %1197 = vmatpush1.bf16.msra.mxu0 %v1179
    %1198 = vmatprep.subr.bf16.mxu0 0
    %1199 = vmatpush1.bf16.msra.mxu0 %v1180
    %1200 = vmatprep.subr.bf16.mxu0 0
    %1201 = vmatpush1.bf16.msra.mxu0 %v1181
    %1202 = vmatprep.subr.bf16.mxu0 0
    %1203 = vmatpush1.bf16.msra.mxu0 %v1182
    %1204 = vmatprep.subr.bf16.mxu0 0
    %1205 = vmatpush1.bf16.msra.mxu0 %v1183
    %1206 = vmatprep.subr.bf16.mxu0 0
    %1207 = vmatpush1.bf16.msra.mxu0 %v1184
    %1208 = vmatprep.subr.bf16.mxu0 0
    %1209 = vmatpush1.bf16.msra.mxu0 %v1185
    %1210 = vmatprep.subr.bf16.mxu0 0
    %1211 = vmatpush1.bf16.msra.mxu0 0
    %1212 = vmatprep.subr.bf16.mxu0 0
    %1213 = vmatpush1.bf16.msra.mxu0 0
    %1214 = vmatprep.subr.bf16.mxu0 0
    %1215 = vmatpush1.bf16.msra.mxu0 0
    %1216 = vmatprep.subr.bf16.mxu0 0
    %1217 = vmatpush1.bf16.msra.mxu0 0
    %1218 = vmatprep.subr.bf16.mxu0 0
    %1219 = vmatpush1.bf16.msra.mxu0 0
    %1220 = vmatprep.subr.bf16.mxu0 0
    %1221 = vmatpush1.bf16.msra.mxu0 0
    %1222 = vmatprep.subr.bf16.mxu0 0
    %1223 = vmatpush1.bf16.msra.mxu0 0
    %1224 = vmatprep.subr.bf16.mxu0 0
    %1225 = vmatpush1.bf16.msra.mxu0 0
    %1226 = vmatprep.mubr.bf16.mxu0 0
    %1227 = vmatmul.mubr.bf16.gmra.mrb[0].mxu0 %v1025
    %v1228 = vpop.f32.mrb[0].mxu0
    %v1229 = vadd.f32 %v1116, %v1228
    %v1230 = vpop.f32.mrb[0].mxu0
    %v1231 = vpop.f32.mrb[0].mxu0
    %v1232 = vadd.f32 %v1119, %v1231
    %v1233 = vpop.f32.mrb[0].mxu0
    %1234 = vmatprep.mubr.bf16.mxu0 0
    %1235 = vmatmul.mubr.bf16.gmra.mrb[0].mxu0 %v1026
    %v1236 = vpop.f32.mrb[0].mxu0
    %v1237 = vadd.f32 %v1124, %v1236
    %v1238 = vpop.f32.mrb[0].mxu0
    %v1239 = vpop.f32.mrb[0].mxu0
    %v1240 = vadd.f32 %v1127, %v1239
    %v1241 = vpop.f32.mrb[0].mxu0
    %1242 = vmatprep.mubr.bf16.mxu0 0
    %1243 = vmatmul.mubr.bf16.gmra.mrb[0].mxu0 %v1027
    %v1244 = vpop.f32.mrb[0].mxu0
    %v1245 = vadd.f32 %v1132, %v1244
    %v1246 = vpop.f32.mrb[0].mxu0
    %v1247 = vpop.f32.mrb[0].mxu0
    %v1248 = vadd.f32 %v1135, %v1247
    %v1249 = vpop.f32.mrb[0].mxu0
    %1250 = vmatprep.mubr.bf16.mxu0 0
    %1251 = vmatmul.mubr.bf16.gmra.mrb[0].mxu0 %v1028
    %v1252 = vpop.f32.mrb[0].mxu0
    %v1253 = vadd.f32 %v1140, %v1252
    %v1254 = vpop.f32.mrb[0].mxu0
    %v1255 = vpop.f32.mrb[0].mxu0
    %v1256 = vadd.f32 %v1143, %v1255
    %v1257 = vpop.f32.mrb[0].mxu0
    %1258 = vdwg.mxu0
    %v1259 = vadd.f32 %v1229, %v53
    %v1260 = vadd.f32 %v1232, %v53
    %v1261 = vadd.f32 %v1237, %v53
    %v1262 = vadd.f32 %v1240, %v53
    %v1263 = vadd.f32 %v1245, %v53
    %v1264 = vadd.f32 %v1248, %v53
    %v1265 = vadd.f32 %v1253, %v53
    %v1266 = vadd.f32 %v1256, %v53
    %v1267 = vmax.f32 %v1259, 0.0
    %v1268 = vmax.f32 %v1260, 0.0
    %v1269 = vmax.f32 %v1261, 0.0
    %v1270 = vmax.f32 %v1262, 0.0
    %v1271 = vmax.f32 %v1263, 0.0
    %v1272 = vmax.f32 %v1264, 0.0
    %v1273 = vmax.f32 %v1265, 0.0
    %v1274 = vmax.f32 %v1266, 0.0
    %v1275 = vpack.c.bf16 %v1268, %v1267
    %v1276 = vpack.c.bf16 %v1270, %v1269
    %v1277 = vpack.c.bf16 %v1272, %v1271
    %v1278 = vpack.c.bf16 %v1274, %v1273
    %v1295 = vunpack.c.l.b16 %v129
    %v1296 = vunpack.c.l.b16 %v130
    %v1297 = vunpack.c.l.b16 %v131
    %v1298 = vunpack.c.l.b16 %v132
    %v1299 = vunpack.c.l.b16 %v133
    %v1300 = vunpack.c.l.b16 %v134
    %v1301 = vunpack.c.l.b16 %v135
    %v1302 = vunpack.c.l.b16 %v136
    %v1303 = vunpack.c.l.b16 %v137
    %v1304 = vunpack.c.l.b16 %v138
    %v1305 = vunpack.c.l.b16 %v139
    %v1306 = vunpack.c.l.b16 %v140
    %v1307 = vunpack.c.l.b16 %v141
    %v1308 = vunpack.c.l.b16 %v142
    %v1309 = vunpack.c.l.b16 %v143
    %v1310 = vunpack.c.l.b16 %v144
    %v1311 = vpack.c.b16 %v1296, %v1295
    %v1312 = vpack.c.b16 %v1298, %v1297
    %v1313 = vpack.c.b16 %v1300, %v1299
    %v1314 = vpack.c.b16 %v1302, %v1301
    %v1315 = vpack.c.b16 %v1304, %v1303
    %v1316 = vpack.c.b16 %v1306, %v1305
    %v1317 = vpack.c.b16 %v1308, %v1307
    %v1318 = vpack.c.b16 %v1310, %v1309
    %1327 = vmatprep.subr.bf16.mxu0 0
    %1328 = vmatpush1.bf16.msra.mxu0 %v1311
    %1329 = vmatprep.subr.bf16.mxu0 0
    %1330 = vmatpush1.bf16.msra.mxu0 %v1312
    %1331 = vmatprep.subr.bf16.mxu0 0
    %1332 = vmatpush1.bf16.msra.mxu0 %v1313
    %1333 = vmatprep.subr.bf16.mxu0 0
    %1334 = vmatpush1.bf16.msra.mxu0 %v1314
    %1335 = vmatprep.subr.bf16.mxu0 0
    %1336 = vmatpush1.bf16.msra.mxu0 %v1315
    %1337 = vmatprep.subr.bf16.mxu0 0
    %1338 = vmatpush1.bf16.msra.mxu0 %v1316
    %1339 = vmatprep.subr.bf16.mxu0 0
    %1340 = vmatpush1.bf16.msra.mxu0 %v1317
    %1341 = vmatprep.subr.bf16.mxu0 0
    %1342 = vmatpush1.bf16.msra.mxu0 %v1318
    %1343 = vmatprep.subr.bf16.mxu0 0
    %1344 = vmatpush1.bf16.msra.mxu0 0
    %1345 = vmatprep.subr.bf16.mxu0 0
    %1346 = vmatpush1.bf16.msra.mxu0 0
    %1347 = vmatprep.subr.bf16.mxu0 0
    %1348 = vmatpush1.bf16.msra.mxu0 0
    %1349 = vmatprep.subr.bf16.mxu0 0
    %1350 = vmatpush1.bf16.msra.mxu0 0
    %1351 = vmatprep.subr.bf16.mxu0 0
    %1352 = vmatpush1.bf16.msra.mxu0 0
    %1353 = vmatprep.subr.bf16.mxu0 0
    %1354 = vmatpush1.bf16.msra.mxu0 0
    %1355 = vmatprep.subr.bf16.mxu0 0
    %1356 = vmatpush1.bf16.msra.mxu0 0
    %1357 = vmatprep.subr.bf16.mxu0 0
    %1358 = vmatpush1.bf16.msra.mxu0 0
    %1359 = vmatprep.mubr.bf16.mxu0 0
    %1360 = vmatmul.mubr.bf16.gmra.mrb[0].mxu0 %v1275
    %v1361 = vpop.f32.mrb[0].mxu0
    %v1362 = vadd.f32 %v54, %v1361
    %v1363 = vpop.f32.mrb[0].mxu0
    %v1364 = vpop.f32.mrb[0].mxu0
    %v1365 = vadd.f32 %v54, %v1364
    %v1366 = vpop.f32.mrb[0].mxu0
    %1367 = vmatprep.mubr.bf16.mxu0 0
    %1368 = vmatmul.mubr.bf16.gmra.mrb[0].mxu0 %v1276
    %v1369 = vpop.f32.mrb[0].mxu0
    %v1370 = vadd.f32 %v54, %v1369
    %v1371 = vpop.f32.mrb[0].mxu0
    %v1372 = vpop.f32.mrb[0].mxu0
    %v1373 = vadd.f32 %v54, %v1372
    %v1374 = vpop.f32.mrb[0].mxu0
    %1375 = vmatprep.mubr.bf16.mxu0 0
    %1376 = vmatmul.mubr.bf16.gmra.mrb[0].mxu0 %v1277
    %v1377 = vpop.f32.mrb[0].mxu0
    %v1378 = vadd.f32 %v54, %v1377
    %v1379 = vpop.f32.mrb[0].mxu0
    %v1380 = vpop.f32.mrb[0].mxu0
    %v1381 = vadd.f32 %v54, %v1380
    %v1382 = vpop.f32.mrb[0].mxu0
    %1383 = vmatprep.mubr.bf16.mxu0 0
    %1384 = vmatmul.mubr.bf16.gmra.mrb[0].mxu0 %v1278
    %v1385 = vpop.f32.mrb[0].mxu0
    %v1386 = vadd.f32 %v54, %v1385
    %v1387 = vpop.f32.mrb[0].mxu0
    %v1388 = vpop.f32.mrb[0].mxu0
    %v1389 = vadd.f32 %v54, %v1388
    %v1390 = vpop.f32.mrb[0].mxu0
    %1391 = vdwg.mxu0
    %v1392 = vmax.f32 %v1362, 0.0
    %v1393 = vmax.f32 %v1365, 0.0
    %v1394 = vmax.f32 %v1370, 0.0
    %v1395 = vmax.f32 %v1373, 0.0
    %v1396 = vmax.f32 %v1378, 0.0
    %v1397 = vmax.f32 %v1381, 0.0
    %v1398 = vmax.f32 %v1386, 0.0
    %v1399 = vmax.f32 %v1389, 0.0
    %v1408 = vrot.slane %v1393, 7
    %vm1409 = vcmask 1041409
    %v1410 = vsel %vm1409, %v1408, %v1392
    %v1411 = vrot.slane %v1394, 6
    %vm1412 = vcmask 1042434
    %v1413 = vsel %vm1412, %v1411, %v1410
    %v1414 = vrot.slane %v1395, 5
    %vm1415 = vcmask 1043459
    %v1416 = vsel %vm1415, %v1414, %v1413
    %v1417 = vrot.slane %v1396, 4
    %vm1418 = vcmask 1044484
    %v1419 = vsel %vm1418, %v1417, %v1416
    %v1420 = vrot.slane %v1397, 3
    %vm1421 = vcmask 1045509
    %v1422 = vsel %vm1421, %v1420, %v1419
    %v1423 = vrot.slane %v1398, 2
    %vm1424 = vcmask 1046534
    %v1425 = vsel %vm1424, %v1423, %v1422
    %v1426 = vrot.slane %v1399, 1
    %vm1427 = vcmask 1047559
    %v1428 = vsel %vm1427, %v1426, %v1425
    %v1430 = vrot.slane %v1392, 1
    %v1431 = vsel %vm1409, %v1393, %v1430
    %v1432 = vrot.slane %v1394, 7
    %v1433 = vsel %vm1412, %v1432, %v1431
    %v1434 = vrot.slane %v1395, 6
    %v1435 = vsel %vm1415, %v1434, %v1433
    %v1436 = vrot.slane %v1396, 5
    %v1437 = vsel %vm1418, %v1436, %v1435
    %v1438 = vrot.slane %v1397, 4
    %v1439 = vsel %vm1421, %v1438, %v1437
    %v1440 = vrot.slane %v1398, 3
    %v1441 = vsel %vm1424, %v1440, %v1439
    %v1442 = vrot.slane %v1399, 2
    %v1443 = vsel %vm1427, %v1442, %v1441
    %v1445 = vrot.slane %v1392, 2
    %v1446 = vrot.slane %v1393, 1
    %v1447 = vsel %vm1409, %v1446, %v1445
    %v1448 = vsel %vm1412, %v1394, %v1447
    %v1449 = vrot.slane %v1395, 7
    %v1450 = vsel %vm1415, %v1449, %v1448
    %v1451 = vrot.slane %v1396, 6
    %v1452 = vsel %vm1418, %v1451, %v1450
    %v1453 = vrot.slane %v1397, 5
    %v1454 = vsel %vm1421, %v1453, %v1452
    %v1455 = vrot.slane %v1398, 4
    %v1456 = vsel %vm1424, %v1455, %v1454
    %v1457 = vrot.slane %v1399, 3
    %v1458 = vsel %vm1427, %v1457, %v1456
    %v1460 = vrot.slane %v1392, 3
    %v1461 = vrot.slane %v1393, 2
    %v1462 = vsel %vm1409, %v1461, %v1460
    %v1463 = vrot.slane %v1394, 1
    %v1464 = vsel %vm1412, %v1463, %v1462
    %v1465 = vsel %vm1415, %v1395, %v1464
    %v1466 = vrot.slane %v1396, 7
    %v1467 = vsel %vm1418, %v1466, %v1465
    %v1468 = vrot.slane %v1397, 6
    %v1469 = vsel %vm1421, %v1468, %v1467
    %v1470 = vrot.slane %v1398, 5
    %v1471 = vsel %vm1424, %v1470, %v1469
    %v1472 = vrot.slane %v1399, 4
    %v1473 = vsel %vm1427, %v1472, %v1471
    %v1475 = vrot.slane %v1392, 4
    %v1476 = vrot.slane %v1393, 3
    %v1477 = vsel %vm1409, %v1476, %v1475
    %v1478 = vrot.slane %v1394, 2
    %v1479 = vsel %vm1412, %v1478, %v1477
    %v1480 = vrot.slane %v1395, 1
    %v1481 = vsel %vm1415, %v1480, %v1479
    %v1482 = vsel %vm1418, %v1396, %v1481
    %v1483 = vrot.slane %v1397, 7
    %v1484 = vsel %vm1421, %v1483, %v1482
    %v1485 = vrot.slane %v1398, 6
    %v1486 = vsel %vm1424, %v1485, %v1484
    %v1487 = vrot.slane %v1399, 5
    %v1488 = vsel %vm1427, %v1487, %v1486
    %v1490 = vrot.slane %v1392, 5
    %v1491 = vrot.slane %v1393, 4
    %v1492 = vsel %vm1409, %v1491, %v1490
    %v1493 = vrot.slane %v1394, 3
    %v1494 = vsel %vm1412, %v1493, %v1492
    %v1495 = vrot.slane %v1395, 2
    %v1496 = vsel %vm1415, %v1495, %v1494
    %v1497 = vrot.slane %v1396, 1
    %v1498 = vsel %vm1418, %v1497, %v1496
    %v1499 = vsel %vm1421, %v1397, %v1498
    %v1500 = vrot.slane %v1398, 7
    %v1501 = vsel %vm1424, %v1500, %v1499
    %v1502 = vrot.slane %v1399, 6
    %v1503 = vsel %vm1427, %v1502, %v1501
    %v1505 = vrot.slane %v1392, 6
    %v1506 = vrot.slane %v1393, 5
    %v1507 = vsel %vm1409, %v1506, %v1505
    %v1508 = vrot.slane %v1394, 4
    %v1509 = vsel %vm1412, %v1508, %v1507
    %v1510 = vrot.slane %v1395, 3
    %v1511 = vsel %vm1415, %v1510, %v1509
    %v1512 = vrot.slane %v1396, 2
    %v1513 = vsel %vm1418, %v1512, %v1511
    %v1514 = vrot.slane %v1397, 1
    %v1515 = vsel %vm1421, %v1514, %v1513
    %v1516 = vsel %vm1424, %v1398, %v1515
    %v1517 = vrot.slane %v1399, 7
    %v1518 = vsel %vm1427, %v1517, %v1516
    %v1520 = vrot.slane %v1392, 7
    %v1521 = vrot.slane %v1393, 6
    %v1522 = vsel %vm1409, %v1521, %v1520
    %v1523 = vrot.slane %v1394, 5
    %v1524 = vsel %vm1412, %v1523, %v1522
    %v1525 = vrot.slane %v1395, 4
    %v1526 = vsel %vm1415, %v1525, %v1524
    %v1527 = vrot.slane %v1396, 3
    %v1528 = vsel %vm1418, %v1527, %v1526
    %v1529 = vrot.slane %v1397, 2
    %v1530 = vsel %vm1421, %v1529, %v1528
    %v1531 = vrot.slane %v1398, 1
    %v1532 = vsel %vm1424, %v1531, %v1530
    %v1533 = vsel %vm1427, %v1399, %v1532
    %v1535 = vpack.c.bf16 %v1428, %v1428
    %v1536 = vpack.c.bf16 %v1443, %v1443
    %v1537 = vpack.c.bf16 %v1458, %v1458
    %v1538 = vpack.c.bf16 %v1473, %v1473
    %v1539 = vpack.c.bf16 %v1488, %v1488
    %v1540 = vpack.c.bf16 %v1503, %v1503
    %v1541 = vpack.c.bf16 %v1518, %v1518
    %v1542 = vpack.c.bf16 %v1533, %v1533
    %v1671 = vunpack.c.l.b16 %v145
    %v1672 = vunpack.c.l.b16 %v146
    %v1673 = vunpack.c.l.b16 %v147
    %v1674 = vunpack.c.l.b16 %v148
    %v1675 = vunpack.c.l.b16 %v149
    %v1676 = vunpack.c.l.b16 %v150
    %v1677 = vunpack.c.l.b16 %v151
    %v1678 = vunpack.c.l.b16 %v152
    %v1679 = vunpack.c.l.b16 %v153
    %v1680 = vunpack.c.l.b16 %v154
    %v1681 = vunpack.c.l.b16 %v155
    %v1682 = vunpack.c.l.b16 %v156
    %v1683 = vunpack.c.l.b16 %v157
    %v1684 = vunpack.c.l.b16 %v158
    %v1685 = vunpack.c.l.b16 %v159
    %v1686 = vunpack.c.l.b16 %v160
    %v1687 = vunpack.c.l.b16 %v161
    %v1688 = vunpack.c.l.b16 %v162
    %v1689 = vunpack.c.l.b16 %v163
    %v1690 = vunpack.c.l.b16 %v164
    %v1691 = vunpack.c.l.b16 %v165
    %v1692 = vunpack.c.l.b16 %v166
    %v1693 = vunpack.c.l.b16 %v167
    %v1694 = vunpack.c.l.b16 %v168
    %v1695 = vunpack.c.l.b16 %v169
    %v1696 = vunpack.c.l.b16 %v170
    %v1697 = vunpack.c.l.b16 %v171
    %v1698 = vunpack.c.l.b16 %v172
    %v1699 = vunpack.c.l.b16 %v173
    %v1700 = vunpack.c.l.b16 %v174
    %v1701 = vunpack.c.l.b16 %v175
    %v1702 = vunpack.c.l.b16 %v176
    %v1703 = vunpack.c.l.b16 %v177
    %v1704 = vunpack.c.l.b16 %v178
    %v1705 = vunpack.c.l.b16 %v179
    %v1706 = vunpack.c.l.b16 %v180
    %v1707 = vunpack.c.l.b16 %v181
    %v1708 = vunpack.c.l.b16 %v182
    %v1709 = vunpack.c.l.b16 %v183
    %v1710 = vunpack.c.l.b16 %v184
    %v1711 = vunpack.c.l.b16 %v185
    %v1712 = vunpack.c.l.b16 %v186
    %v1713 = vunpack.c.l.b16 %v187
    %v1714 = vunpack.c.l.b16 %v188
    %v1715 = vunpack.c.l.b16 %v189
    %v1716 = vunpack.c.l.b16 %v190
    %v1717 = vunpack.c.l.b16 %v191
    %v1718 = vunpack.c.l.b16 %v192
    %v1719 = vunpack.c.l.b16 %v193
    %v1720 = vunpack.c.l.b16 %v194
    %v1721 = vunpack.c.l.b16 %v195
    %v1722 = vunpack.c.l.b16 %v196
    %v1723 = vunpack.c.l.b16 %v197
    %v1724 = vunpack.c.l.b16 %v198
    %v1725 = vunpack.c.l.b16 %v199
    %v1726 = vunpack.c.l.b16 %v200
    %v1727 = vunpack.c.l.b16 %v201
    %v1728 = vunpack.c.l.b16 %v202
    %v1729 = vunpack.c.l.b16 %v203
    %v1730 = vunpack.c.l.b16 %v204
    %v1731 = vunpack.c.l.b16 %v205
    %v1732 = vunpack.c.l.b16 %v206
    %v1733 = vunpack.c.l.b16 %v207
    %v1734 = vunpack.c.l.b16 %v208
    %v1735 = vunpack.c.l.b16 %v209
    %v1736 = vunpack.c.l.b16 %v210
    %v1737 = vunpack.c.l.b16 %v211
    %v1738 = vunpack.c.l.b16 %v212
    %v1739 = vunpack.c.l.b16 %v213
    %v1740 = vunpack.c.l.b16 %v214
    %v1741 = vunpack.c.l.b16 %v215
    %v1742 = vunpack.c.l.b16 %v216
    %v1743 = vunpack.c.l.b16 %v217
    %v1744 = vunpack.c.l.b16 %v218
    %v1745 = vunpack.c.l.b16 %v219
    %v1746 = vunpack.c.l.b16 %v220
    %v1747 = vunpack.c.l.b16 %v221
    %v1748 = vunpack.c.l.b16 %v222
    %v1749 = vunpack.c.l.b16 %v223
    %v1750 = vunpack.c.l.b16 %v224
    %v1751 = vunpack.c.l.b16 %v225
    %v1752 = vunpack.c.l.b16 %v226
    %v1753 = vunpack.c.l.b16 %v227
    %v1754 = vunpack.c.l.b16 %v228
    %v1755 = vunpack.c.l.b16 %v229
    %v1756 = vunpack.c.l.b16 %v230
    %v1757 = vunpack.c.l.b16 %v231
    %v1758 = vunpack.c.l.b16 %v232
    %v1759 = vunpack.c.l.b16 %v233
    %v1760 = vunpack.c.l.b16 %v234
    %v1761 = vunpack.c.l.b16 %v235
    %v1762 = vunpack.c.l.b16 %v236
    %v1763 = vunpack.c.l.b16 %v237
    %v1764 = vunpack.c.l.b16 %v238
    %v1765 = vunpack.c.l.b16 %v239
    %v1766 = vunpack.c.l.b16 %v240
    %v1767 = vunpack.c.l.b16 %v241
    %v1768 = vunpack.c.l.b16 %v242
    %v1769 = vunpack.c.l.b16 %v243
    %v1770 = vunpack.c.l.b16 %v244
    %v1771 = vunpack.c.l.b16 %v245
    %v1772 = vunpack.c.l.b16 %v246
    %v1773 = vunpack.c.l.b16 %v247
    %v1774 = vunpack.c.l.b16 %v248
    %v1775 = vunpack.c.l.b16 %v249
    %v1776 = vunpack.c.l.b16 %v250
    %v1777 = vunpack.c.l.b16 %v251
    %v1778 = vunpack.c.l.b16 %v252
    %v1779 = vunpack.c.l.b16 %v253
    %v1780 = vunpack.c.l.b16 %v254
    %v1781 = vunpack.c.l.b16 %v255
    %v1782 = vunpack.c.l.b16 %v256
    %v1783 = vunpack.c.l.b16 %v257
    %v1784 = vunpack.c.l.b16 %v258
    %v1785 = vunpack.c.l.b16 %v259
    %v1786 = vunpack.c.l.b16 %v260
    %v1787 = vunpack.c.l.b16 %v261
    %v1788 = vunpack.c.l.b16 %v262
    %v1789 = vunpack.c.l.b16 %v263
    %v1790 = vunpack.c.l.b16 %v264
    %v1791 = vunpack.c.l.b16 %v265
    %v1792 = vunpack.c.l.b16 %v266
    %v1793 = vunpack.c.l.b16 %v267
    %v1794 = vunpack.c.l.b16 %v268
    %v1795 = vunpack.c.l.b16 %v269
    %v1796 = vunpack.c.l.b16 %v270
    %v1797 = vunpack.c.l.b16 %v271
    %v1798 = vunpack.c.l.b16 %v272
    %v1799 = vpack.c.b16 %v1672, %v1671
    %v1800 = vpack.c.b16 %v1674, %v1673
    %v1801 = vpack.c.b16 %v1676, %v1675
    %v1802 = vpack.c.b16 %v1678, %v1677
    %v1803 = vpack.c.b16 %v1680, %v1679
    %v1804 = vpack.c.b16 %v1682, %v1681
    %v1805 = vpack.c.b16 %v1684, %v1683
    %v1806 = vpack.c.b16 %v1686, %v1685
    %v1807 = vpack.c.b16 %v1688, %v1687
    %v1808 = vpack.c.b16 %v1690, %v1689
    %v1809 = vpack.c.b16 %v1692, %v1691
    %v1810 = vpack.c.b16 %v1694, %v1693
    %v1811 = vpack.c.b16 %v1696, %v1695
    %v1812 = vpack.c.b16 %v1698, %v1697
    %v1813 = vpack.c.b16 %v1700, %v1699
    %v1814 = vpack.c.b16 %v1702, %v1701
    %v1815 = vpack.c.b16 %v1704, %v1703
    %v1816 = vpack.c.b16 %v1706, %v1705
    %v1817 = vpack.c.b16 %v1708, %v1707
    %v1818 = vpack.c.b16 %v1710, %v1709
    %v1819 = vpack.c.b16 %v1712, %v1711
    %v1820 = vpack.c.b16 %v1714, %v1713
    %v1821 = vpack.c.b16 %v1716, %v1715
    %v1822 = vpack.c.b16 %v1718, %v1717
    %v1823 = vpack.c.b16 %v1720, %v1719
    %v1824 = vpack.c.b16 %v1722, %v1721
    %v1825 = vpack.c.b16 %v1724, %v1723
    %v1826 = vpack.c.b16 %v1726, %v1725
    %v1827 = vpack.c.b16 %v1728, %v1727
    %v1828 = vpack.c.b16 %v1730, %v1729
    %v1829 = vpack.c.b16 %v1732, %v1731
    %v1830 = vpack.c.b16 %v1734, %v1733
    %v1831 = vpack.c.b16 %v1736, %v1735
    %v1832 = vpack.c.b16 %v1738, %v1737
    %v1833 = vpack.c.b16 %v1740, %v1739
    %v1834 = vpack.c.b16 %v1742, %v1741
    %v1835 = vpack.c.b16 %v1744, %v1743
    %v1836 = vpack.c.b16 %v1746, %v1745
    %v1837 = vpack.c.b16 %v1748, %v1747
    %v1838 = vpack.c.b16 %v1750, %v1749
    %v1839 = vpack.c.b16 %v1752, %v1751
    %v1840 = vpack.c.b16 %v1754, %v1753
    %v1841 = vpack.c.b16 %v1756, %v1755
    %v1842 = vpack.c.b16 %v1758, %v1757
    %v1843 = vpack.c.b16 %v1760, %v1759
    %v1844 = vpack.c.b16 %v1762, %v1761
    %v1845 = vpack.c.b16 %v1764, %v1763
    %v1846 = vpack.c.b16 %v1766, %v1765
    %v1847 = vpack.c.b16 %v1768, %v1767
    %v1848 = vpack.c.b16 %v1770, %v1769
    %v1849 = vpack.c.b16 %v1772, %v1771
    %v1850 = vpack.c.b16 %v1774, %v1773
    %v1851 = vpack.c.b16 %v1776, %v1775
    %v1852 = vpack.c.b16 %v1778, %v1777
    %v1853 = vpack.c.b16 %v1780, %v1779
    %v1854 = vpack.c.b16 %v1782, %v1781
    %v1855 = vpack.c.b16 %v1784, %v1783
    %v1856 = vpack.c.b16 %v1786, %v1785
    %v1857 = vpack.c.b16 %v1788, %v1787
    %v1858 = vpack.c.b16 %v1790, %v1789
    %v1859 = vpack.c.b16 %v1792, %v1791
    %v1860 = vpack.c.b16 %v1794, %v1793
    %v1861 = vpack.c.b16 %v1796, %v1795
    %v1862 = vpack.c.b16 %v1798, %v1797
    %1927 = vmatprep.subr.bf16.mxu0 0
    %1928 = vmatpush1.bf16.msra.mxu0 %v1799
    %1929 = vmatprep.subr.bf16.mxu0 0
    %1930 = vmatpush1.bf16.msra.mxu0 %v1800
    %1931 = vmatprep.subr.bf16.mxu0 0
    %1932 = vmatpush1.bf16.msra.mxu0 %v1801
    %1933 = vmatprep.subr.bf16.mxu0 0
    %1934 = vmatpush1.bf16.msra.mxu0 %v1802
    %1935 = vmatprep.subr.bf16.mxu0 0
    %1936 = vmatpush1.bf16.msra.mxu0 %v1803
    %1937 = vmatprep.subr.bf16.mxu0 0
    %1938 = vmatpush1.bf16.msra.mxu0 %v1804
    %1939 = vmatprep.subr.bf16.mxu0 0
    %1940 = vmatpush1.bf16.msra.mxu0 %v1805
    %1941 = vmatprep.subr.bf16.mxu0 0
    %1942 = vmatpush1.bf16.msra.mxu0 %v1806
    %1943 = vmatprep.subr.bf16.mxu0 0
    %1944 = vmatpush1.bf16.msra.mxu0 %v1807
    %1945 = vmatprep.subr.bf16.mxu0 0
    %1946 = vmatpush1.bf16.msra.mxu0 %v1808
    %1947 = vmatprep.subr.bf16.mxu0 0
    %1948 = vmatpush1.bf16.msra.mxu0 %v1809
    %1949 = vmatprep.subr.bf16.mxu0 0
    %1950 = vmatpush1.bf16.msra.mxu0 %v1810
    %1951 = vmatprep.subr.bf16.mxu0 0
    %1952 = vmatpush1.bf16.msra.mxu0 %v1811
    %1953 = vmatprep.subr.bf16.mxu0 0
    %1954 = vmatpush1.bf16.msra.mxu0 %v1812
    %1955 = vmatprep.subr.bf16.mxu0 0
    %1956 = vmatpush1.bf16.msra.mxu0 %v1813
    %1957 = vmatprep.subr.bf16.mxu0 0
    %1958 = vmatpush1.bf16.msra.mxu0 %v1814
    %1959 = vmatprep.mubr.bf16.mxu0 %v1536
    %1960 = vmatmul.mubr.bf16.gmra.mrb[0].mxu0 %v1535
    %v1961 = vpop.f32.mrb[0].mxu0
    %v1962 = vadd.f32 %v55, %v1961
    %v1963 = vpop.f32.mrb[0].mxu0
    %v1964 = vpop.f32.mrb[0].mxu0
    %v1965 = vpop.f32.mrb[0].mxu0
    %1966 = vdwg.mxu0
    %1967 = vmatprep.subr.bf16.mxu0 0
    %1968 = vmatpush1.bf16.msra.mxu0 %v1815
    %1969 = vmatprep.subr.bf16.mxu0 0
    %1970 = vmatpush1.bf16.msra.mxu0 %v1816
    %1971 = vmatprep.subr.bf16.mxu0 0
    %1972 = vmatpush1.bf16.msra.mxu0 %v1817
    %1973 = vmatprep.subr.bf16.mxu0 0
    %1974 = vmatpush1.bf16.msra.mxu0 %v1818
    %1975 = vmatprep.subr.bf16.mxu0 0
    %1976 = vmatpush1.bf16.msra.mxu0 %v1819
    %1977 = vmatprep.subr.bf16.mxu0 0
    %1978 = vmatpush1.bf16.msra.mxu0 %v1820
    %1979 = vmatprep.subr.bf16.mxu0 0
    %1980 = vmatpush1.bf16.msra.mxu0 %v1821
    %1981 = vmatprep.subr.bf16.mxu0 0
    %1982 = vmatpush1.bf16.msra.mxu0 %v1822
    %1983 = vmatprep.subr.bf16.mxu0 0
    %1984 = vmatpush1.bf16.msra.mxu0 %v1823
    %1985 = vmatprep.subr.bf16.mxu0 0
    %1986 = vmatpush1.bf16.msra.mxu0 %v1824
    %1987 = vmatprep.subr.bf16.mxu0 0
    %1988 = vmatpush1.bf16.msra.mxu0 %v1825
    %1989 = vmatprep.subr.bf16.mxu0 0
    %1990 = vmatpush1.bf16.msra.mxu0 %v1826
    %1991 = vmatprep.subr.bf16.mxu0 0
    %1992 = vmatpush1.bf16.msra.mxu0 %v1827
    %1993 = vmatprep.subr.bf16.mxu0 0
    %1994 = vmatpush1.bf16.msra.mxu0 %v1828
    %1995 = vmatprep.subr.bf16.mxu0 0
    %1996 = vmatpush1.bf16.msra.mxu0 %v1829
    %1997 = vmatprep.subr.bf16.mxu0 0
    %1998 = vmatpush1.bf16.msra.mxu0 %v1830
    %1999 = vmatprep.mubr.bf16.mxu0 %v1538
    %2000 = vmatmul.mubr.bf16.gmra.mrb[0].mxu0 %v1537
    %v2001 = vpop.f32.mrb[0].mxu0
    %v2002 = vadd.f32 %v1962, %v2001
    %v2003 = vpop.f32.mrb[0].mxu0
    %v2004 = vpop.f32.mrb[0].mxu0
    %v2005 = vpop.f32.mrb[0].mxu0
    %2006 = vdwg.mxu0
    %2007 = vmatprep.subr.bf16.mxu0 0
    %2008 = vmatpush1.bf16.msra.mxu0 %v1831
    %2009 = vmatprep.subr.bf16.mxu0 0
    %2010 = vmatpush1.bf16.msra.mxu0 %v1832
    %2011 = vmatprep.subr.bf16.mxu0 0
    %2012 = vmatpush1.bf16.msra.mxu0 %v1833
    %2013 = vmatprep.subr.bf16.mxu0 0
    %2014 = vmatpush1.bf16.msra.mxu0 %v1834
    %2015 = vmatprep.subr.bf16.mxu0 0
    %2016 = vmatpush1.bf16.msra.mxu0 %v1835
    %2017 = vmatprep.subr.bf16.mxu0 0
    %2018 = vmatpush1.bf16.msra.mxu0 %v1836
    %2019 = vmatprep.subr.bf16.mxu0 0
    %2020 = vmatpush1.bf16.msra.mxu0 %v1837
    %2021 = vmatprep.subr.bf16.mxu0 0
    %2022 = vmatpush1.bf16.msra.mxu0 %v1838
    %2023 = vmatprep.subr.bf16.mxu0 0
    %2024 = vmatpush1.bf16.msra.mxu0 %v1839
    %2025 = vmatprep.subr.bf16.mxu0 0
    %2026 = vmatpush1.bf16.msra.mxu0 %v1840
    %2027 = vmatprep.subr.bf16.mxu0 0
    %2028 = vmatpush1.bf16.msra.mxu0 %v1841
    %2029 = vmatprep.subr.bf16.mxu0 0
    %2030 = vmatpush1.bf16.msra.mxu0 %v1842
    %2031 = vmatprep.subr.bf16.mxu0 0
    %2032 = vmatpush1.bf16.msra.mxu0 %v1843
    %2033 = vmatprep.subr.bf16.mxu0 0
    %2034 = vmatpush1.bf16.msra.mxu0 %v1844
    %2035 = vmatprep.subr.bf16.mxu0 0
    %2036 = vmatpush1.bf16.msra.mxu0 %v1845
    %2037 = vmatprep.subr.bf16.mxu0 0
    %2038 = vmatpush1.bf16.msra.mxu0 %v1846
    %2039 = vmatprep.mubr.bf16.mxu0 %v1540
    %2040 = vmatmul.mubr.bf16.gmra.mrb[0].mxu0 %v1539
    %v2041 = vpop.f32.mrb[0].mxu0
    %v2042 = vadd.f32 %v2002, %v2041
    %v2043 = vpop.f32.mrb[0].mxu0
    %v2044 = vpop.f32.mrb[0].mxu0
    %v2045 = vpop.f32.mrb[0].mxu0
    %2046 = vdwg.mxu0
    %2047 = vmatprep.subr.bf16.mxu0 0
    %2048 = vmatpush1.bf16.msra.mxu0 %v1847
    %2049 = vmatprep.subr.bf16.mxu0 0
    %2050 = vmatpush1.bf16.msra.mxu0 %v1848
    %2051 = vmatprep.subr.bf16.mxu0 0
    %2052 = vmatpush1.bf16.msra.mxu0 %v1849
    %2053 = vmatprep.subr.bf16.mxu0 0
    %2054 = vmatpush1.bf16.msra.mxu0 %v1850
    %2055 = vmatprep.subr.bf16.mxu0 0
    %2056 = vmatpush1.bf16.msra.mxu0 %v1851
    %2057 = vmatprep.subr.bf16.mxu0 0
    %2058 = vmatpush1.bf16.msra.mxu0 %v1852
    %2059 = vmatprep.subr.bf16.mxu0 0
    %2060 = vmatpush1.bf16.msra.mxu0 %v1853
    %2061 = vmatprep.subr.bf16.mxu0 0
    %2062 = vmatpush1.bf16.msra.mxu0 %v1854
    %2063 = vmatprep.subr.bf16.mxu0 0
    %2064 = vmatpush1.bf16.msra.mxu0 %v1855
    %2065 = vmatprep.subr.bf16.mxu0 0
    %2066 = vmatpush1.bf16.msra.mxu0 %v1856
    %2067 = vmatprep.subr.bf16.mxu0 0
    %2068 = vmatpush1.bf16.msra.mxu0 %v1857
    %2069 = vmatprep.subr.bf16.mxu0 0
    %2070 = vmatpush1.bf16.msra.mxu0 %v1858
    %2071 = vmatprep.subr.bf16.mxu0 0
    %2072 = vmatpush1.bf16.msra.mxu0 %v1859
    %2073 = vmatprep.subr.bf16.mxu0 0
    %2074 = vmatpush1.bf16.msra.mxu0 %v1860
    %2075 = vmatprep.subr.bf16.mxu0 0
    %2076 = vmatpush1.bf16.msra.mxu0 %v1861
    %2077 = vmatprep.subr.bf16.mxu0 0
    %2078 = vmatpush1.bf16.msra.mxu0 %v1862
    %2079 = vmatprep.mubr.bf16.mxu0 %v1542
    %2080 = vmatmul.mubr.bf16.gmra.mrb[0].mxu0 %v1541
    %v2081 = vpop.f32.mrb[0].mxu0
    %v2082 = vadd.f32 %v2042, %v2081
    %v2083 = vpop.f32.mrb[0].mxu0
    %v2084 = vpop.f32.mrb[0].mxu0
    %v2085 = vpop.f32.mrb[0].mxu0
    %2086 = vdwg.mxu0
    %v2087 = vmax.f32 %v2082, 0.0
    %v2088 = vpack.c.bf16 %v2087, %v2087
    %v2105 = vunpack.c.l.b16 %v273
    %v2106 = vunpack.c.l.b16 %v274
    %v2107 = vunpack.c.l.b16 %v275
    %v2108 = vunpack.c.l.b16 %v276
    %v2109 = vunpack.c.l.b16 %v277
    %v2110 = vunpack.c.l.b16 %v278
    %v2111 = vunpack.c.l.b16 %v279
    %v2112 = vunpack.c.l.b16 %v280
    %v2113 = vunpack.c.l.b16 %v281
    %v2114 = vunpack.c.l.b16 %v282
    %v2115 = vunpack.c.l.b16 %v283
    %v2116 = vunpack.c.l.b16 %v284
    %v2117 = vunpack.c.l.b16 %v285
    %v2118 = vunpack.c.l.b16 %v286
    %v2119 = vunpack.c.l.b16 %v287
    %v2120 = vunpack.c.l.b16 %v288
    %v2121 = vpack.c.b16 %v2106, %v2105
    %v2122 = vpack.c.b16 %v2108, %v2107
    %v2123 = vpack.c.b16 %v2110, %v2109
    %v2124 = vpack.c.b16 %v2112, %v2111
    %v2125 = vpack.c.b16 %v2114, %v2113
    %v2126 = vpack.c.b16 %v2116, %v2115
    %v2127 = vpack.c.b16 %v2118, %v2117
    %v2128 = vpack.c.b16 %v2120, %v2119
    %2137 = vmatprep.subr.bf16.mxu0 0
    %2138 = vmatpush1.bf16.msra.mxu0 %v2121
    %2139 = vmatprep.subr.bf16.mxu0 0
    %2140 = vmatpush1.bf16.msra.mxu0 %v2122
    %2141 = vmatprep.subr.bf16.mxu0 0
    %2142 = vmatpush1.bf16.msra.mxu0 %v2123
    %2143 = vmatprep.subr.bf16.mxu0 0
    %2144 = vmatpush1.bf16.msra.mxu0 %v2124
    %2145 = vmatprep.subr.bf16.mxu0 0
    %2146 = vmatpush1.bf16.msra.mxu0 %v2125
    %2147 = vmatprep.subr.bf16.mxu0 0
    %2148 = vmatpush1.bf16.msra.mxu0 %v2126
    %2149 = vmatprep.subr.bf16.mxu0 0
    %2150 = vmatpush1.bf16.msra.mxu0 %v2127
    %2151 = vmatprep.subr.bf16.mxu0 0
    %2152 = vmatpush1.bf16.msra.mxu0 %v2128
    %2153 = vmatprep.subr.bf16.mxu0 0
    %2154 = vmatpush1.bf16.msra.mxu0 0
    %2155 = vmatprep.subr.bf16.mxu0 0
    %2156 = vmatpush1.bf16.msra.mxu0 0
    %2157 = vmatprep.subr.bf16.mxu0 0
    %2158 = vmatpush1.bf16.msra.mxu0 0
    %2159 = vmatprep.subr.bf16.mxu0 0
    %2160 = vmatpush1.bf16.msra.mxu0 0
    %2161 = vmatprep.subr.bf16.mxu0 0
    %2162 = vmatpush1.bf16.msra.mxu0 0
    %2163 = vmatprep.subr.bf16.mxu0 0
    %2164 = vmatpush1.bf16.msra.mxu0 0
    %2165 = vmatprep.subr.bf16.mxu0 0
    %2166 = vmatpush1.bf16.msra.mxu0 0
    %2167 = vmatprep.subr.bf16.mxu0 0
    %2168 = vmatpush1.bf16.msra.mxu0 0
    %2169 = vmatprep.mubr.bf16.mxu0 0
    %2170 = vmatmul.mubr.bf16.gmra.mrb[0].mxu0 %v2088
    %v2171 = vpop.f32.mrb[0].mxu0
    %v2172 = vadd.f32 %v56, %v2171
    %v2173 = vpop.f32.mrb[0].mxu0
    %v2174 = vpop.f32.mrb[0].mxu0
    %v2175 = vpop.f32.mrb[0].mxu0
    %2176 = vdwg.mxu0
    %v2177 = vmax.f32 %v2172, 0.0
    %v2179 = vcombine.high %v2177, %v2177
    %vm2181 = vcmask 1043456
    %v2182 = vsel %vm2181, %v2177, 0.0
    %v2183 = vrot.slane %v2182, 4
    %v2184 = vadd.f32 %v2182, %v2183
    %v2185 = vrot.slane %v2184, 2
    %v2186 = vadd.f32 %v2184, %v2185
    %v2187 = vrot.slane %v2186, 1
    %v2188 = vadd.f32 %v2186, %v2187
    %v2189 = vsel %vm2181, %v2179, 0.0
    %v2190 = vrot.slane %v2189, 4
    %v2191 = vadd.f32 %v2189, %v2190
    %v2192 = vrot.slane %v2191, 2
    %v2193 = vadd.f32 %v2191, %v2192
    %v2194 = vrot.slane %v2193, 1
    %v2195 = vadd.f32 %v2193, %v2194
    %v2196 = vmul.f32 %v2188, 0.25
    %v2197 = vmul.f32 %v2195, 0.25
    %v2198 = vpack.c.bf16 %v2196, %v2196
    %v2199 = vpack.c.bf16 %v2197, %v2197
    %v2202 = vunpack.c.l.b16 %v2198
    %v2203 = vunpack.c.l.b16 %v2199
    %v2204 = vsel %vm1409, %v2203, %v2202
    %v2205 = vpack.c.b16 %v2204, %v2204
    %v2223 = vunpack.c.l.b16 %v289
    %v2224 = vunpack.c.l.b16 %v290
    %v2225 = vunpack.c.l.b16 %v291
    %v2226 = vunpack.c.l.b16 %v292
    %v2227 = vunpack.c.l.b16 %v293
    %v2228 = vunpack.c.l.b16 %v294
    %v2229 = vunpack.c.l.b16 %v295
    %v2230 = vunpack.c.l.b16 %v296
    %v2231 = vunpack.c.l.b16 %v297
    %v2232 = vunpack.c.l.b16 %v298
    %v2233 = vunpack.c.l.b16 %v299
    %v2234 = vunpack.c.l.b16 %v300
    %v2235 = vunpack.c.l.b16 %v301
    %v2236 = vunpack.c.l.b16 %v302
    %v2237 = vunpack.c.l.b16 %v303
    %v2238 = vunpack.c.l.b16 %v304
    %v2239 = vpack.c.b16 %v2224, %v2223
    %v2240 = vpack.c.b16 %v2226, %v2225
    %v2241 = vpack.c.b16 %v2228, %v2227
    %v2242 = vpack.c.b16 %v2230, %v2229
    %v2243 = vpack.c.b16 %v2232, %v2231
    %v2244 = vpack.c.b16 %v2234, %v2233
    %v2245 = vpack.c.b16 %v2236, %v2235
    %v2246 = vpack.c.b16 %v2238, %v2237
    %2255 = vmatprep.subr.bf16.mxu0 0
    %2256 = vmatpush1.bf16.msra.mxu0 %v2239
    %2257 = vmatprep.subr.bf16.mxu0 0
    %2258 = vmatpush1.bf16.msra.mxu0 %v2240
    %2259 = vmatprep.subr.bf16.mxu0 0
    %2260 = vmatpush1.bf16.msra.mxu0 %v2241
    %2261 = vmatprep.subr.bf16.mxu0 0
    %2262 = vmatpush1.bf16.msra.mxu0 %v2242
    %2263 = vmatprep.subr.bf16.mxu0 0
    %2264 = vmatpush1.bf16.msra.mxu0 %v2243
    %2265 = vmatprep.subr.bf16.mxu0 0
    %2266 = vmatpush1.bf16.msra.mxu0 %v2244
    %2267 = vmatprep.subr.bf16.mxu0 0
    %2268 = vmatpush1.bf16.msra.mxu0 %v2245
    %2269 = vmatprep.subr.bf16.mxu0 0
    %2270 = vmatpush1.bf16.msra.mxu0 %v2246
    %2271 = vmatprep.subr.bf16.mxu0 0
    %2272 = vmatpush1.bf16.msra.mxu0 0
    %2273 = vmatprep.subr.bf16.mxu0 0
    %2274 = vmatpush1.bf16.msra.mxu0 0
    %2275 = vmatprep.subr.bf16.mxu0 0
    %2276 = vmatpush1.bf16.msra.mxu0 0
    %2277 = vmatprep.subr.bf16.mxu0 0
    %2278 = vmatpush1.bf16.msra.mxu0 0
    %2279 = vmatprep.subr.bf16.mxu0 0
    %2280 = vmatpush1.bf16.msra.mxu0 0
    %2281 = vmatprep.subr.bf16.mxu0 0
    %2282 = vmatpush1.bf16.msra.mxu0 0
    %2283 = vmatprep.subr.bf16.mxu0 0
    %2284 = vmatpush1.bf16.msra.mxu0 0
    %2285 = vmatprep.subr.bf16.mxu0 0
    %2286 = vmatpush1.bf16.msra.mxu0 0
    %2287 = vmatprep.mubr.bf16.mxu0 0
    %2288 = vmatmul.mubr.bf16.gmra.mrb[0].mxu0 %v2205
    %v2289 = vpop.f32.mrb[0].mxu0
    %v2290 = vadd.f32 %v57, %v2289
    %v2291 = vpop.f32.mrb[0].mxu0
    %v2292 = vpop.f32.mrb[0].mxu0
    %v2293 = vpop.f32.mrb[0].mxu0
    %2294 = vdwg.mxu0
    %v2295 = vmax.f32 %v2290, 0.0
    %v2296 = vpack.c.bf16 %v2295, %v2295
    %v2298 = vlaneseq
    %v2299 = vshrl.u32 %v2298, 7
    %v2300 = vsub.s32 0, %v2299
    %v2301 = vrot.slane %v59, %v2300
    %v2302 = vlaneseq
    %v2303 = vshrl.u32 %v2302, 7
    %v2304 = vsub.s32 1, %v2303
    %v2305 = vrot.slane %v59, %v2304
    %v2306 = vlaneseq
    %v2307 = vshrl.u32 %v2306, 7
    %v2308 = vsub.s32 2, %v2307
    %v2309 = vrot.slane %v59, %v2308
    %v2310 = vlaneseq
    %v2311 = vshrl.u32 %v2310, 7
    %v2312 = vsub.s32 3, %v2311
    %v2313 = vrot.slane %v59, %v2312
    %v2350 = vunpack.c.l.b16 %v305
    %v2351 = vunpack.c.h.b16 %v305
    %v2352 = vunpack.c.l.b16 %v306
    %v2353 = vunpack.c.h.b16 %v306
    %v2354 = vunpack.c.l.b16 %v307
    %v2355 = vunpack.c.h.b16 %v307
    %v2356 = vunpack.c.l.b16 %v308
    %v2357 = vunpack.c.h.b16 %v308
    %v2358 = vunpack.c.l.b16 %v309
    %v2359 = vunpack.c.h.b16 %v309
    %v2360 = vunpack.c.l.b16 %v310
    %v2361 = vunpack.c.h.b16 %v310
    %v2362 = vunpack.c.l.b16 %v311
    %v2363 = vunpack.c.h.b16 %v311
    %v2364 = vunpack.c.l.b16 %v312
    %v2365 = vunpack.c.h.b16 %v312
    %v2366 = vunpack.c.l.b16 %v313
    %v2367 = vunpack.c.h.b16 %v313
    %v2368 = vunpack.c.l.b16 %v314
    %v2369 = vunpack.c.h.b16 %v314
    %v2370 = vunpack.c.l.b16 %v315
    %v2371 = vunpack.c.h.b16 %v315
    %v2372 = vunpack.c.l.b16 %v316
    %v2373 = vunpack.c.h.b16 %v316
    %v2374 = vunpack.c.l.b16 %v317
    %v2375 = vunpack.c.h.b16 %v317
    %v2376 = vunpack.c.l.b16 %v318
    %v2377 = vunpack.c.h.b16 %v318
    %v2378 = vunpack.c.l.b16 %v319
    %v2379 = vunpack.c.h.b16 %v319
    %v2380 = vunpack.c.l.b16 %v320
    %v2381 = vunpack.c.h.b16 %v320
    %v2382 = vunpack.c.l.b16 %v321
    %v2383 = vunpack.c.h.b16 %v321
    %v2384 = vunpack.c.l.b16 %v322
    %v2385 = vunpack.c.h.b16 %v322
    %v2386 = vunpack.c.l.b16 %v323
    %v2387 = vunpack.c.h.b16 %v323
    %v2388 = vunpack.c.l.b16 %v324
    %v2389 = vunpack.c.h.b16 %v324
    %v2390 = vunpack.c.l.b16 %v325
    %v2391 = vunpack.c.h.b16 %v325
    %v2392 = vunpack.c.l.b16 %v326
    %v2393 = vunpack.c.h.b16 %v326
    %v2394 = vunpack.c.l.b16 %v327
    %v2395 = vunpack.c.h.b16 %v327
    %v2396 = vunpack.c.l.b16 %v328
    %v2397 = vunpack.c.h.b16 %v328
    %v2398 = vunpack.c.l.b16 %v329
    %v2399 = vunpack.c.h.b16 %v329
    %v2400 = vunpack.c.l.b16 %v330
    %v2401 = vunpack.c.h.b16 %v330
    %v2402 = vunpack.c.l.b16 %v331
    %v2403 = vunpack.c.h.b16 %v331
    %v2404 = vunpack.c.l.b16 %v332
    %v2405 = vunpack.c.h.b16 %v332
    %v2406 = vunpack.c.l.b16 %v333
    %v2407 = vunpack.c.h.b16 %v333
    %v2408 = vunpack.c.l.b16 %v334
    %v2409 = vunpack.c.h.b16 %v334
    %v2410 = vunpack.c.l.b16 %v335
    %v2411 = vunpack.c.h.b16 %v335
    %v2412 = vunpack.c.l.b16 %v336
    %v2413 = vunpack.c.h.b16 %v336
    %v2414 = vpack.c.b16 %v2354, %v2350
    %v2415 = vpack.c.b16 %v2355, %v2351
    %v2416 = vpack.c.b16 %v2356, %v2352
    %v2417 = vpack.c.b16 %v2357, %v2353
    %v2418 = vpack.c.b16 %v2362, %v2358
    %v2419 = vpack.c.b16 %v2363, %v2359
    %v2420 = vpack.c.b16 %v2364, %v2360
    %v2421 = vpack.c.b16 %v2365, %v2361
    %v2422 = vpack.c.b16 %v2370, %v2366
    %v2423 = vpack.c.b16 %v2371, %v2367
    %v2424 = vpack.c.b16 %v2372, %v2368
    %v2425 = vpack.c.b16 %v2373, %v2369
    %v2426 = vpack.c.b16 %v2378, %v2374
    %v2427 = vpack.c.b16 %v2379, %v2375
    %v2428 = vpack.c.b16 %v2380, %v2376
    %v2429 = vpack.c.b16 %v2381, %v2377
    %v2430 = vpack.c.b16 %v2386, %v2382
    %v2431 = vpack.c.b16 %v2387, %v2383
    %v2432 = vpack.c.b16 %v2388, %v2384
    %v2433 = vpack.c.b16 %v2389, %v2385
    %v2434 = vpack.c.b16 %v2394, %v2390
    %v2435 = vpack.c.b16 %v2395, %v2391
    %v2436 = vpack.c.b16 %v2396, %v2392
    %v2437 = vpack.c.b16 %v2397, %v2393
    %v2438 = vpack.c.b16 %v2402, %v2398
    %v2439 = vpack.c.b16 %v2403, %v2399
    %v2440 = vpack.c.b16 %v2404, %v2400
    %v2441 = vpack.c.b16 %v2405, %v2401
    %v2442 = vpack.c.b16 %v2410, %v2406
    %v2443 = vpack.c.b16 %v2411, %v2407
    %v2444 = vpack.c.b16 %v2412, %v2408
    %v2445 = vpack.c.b16 %v2413, %v2409
    %2478 = vmatprep.subr.bf16.mxu0 %v2415
    %2479 = vmatpush1.bf16.msra.mxu0 %v2414
    %2480 = vmatprep.subr.bf16.mxu0 %v2419
    %2481 = vmatpush1.bf16.msra.mxu0 %v2418
    %2482 = vmatprep.subr.bf16.mxu0 %v2423
    %2483 = vmatpush1.bf16.msra.mxu0 %v2422
    %2484 = vmatprep.subr.bf16.mxu0 %v2427
    %2485 = vmatpush1.bf16.msra.mxu0 %v2426
    %2486 = vmatprep.subr.bf16.mxu0 %v2431
    %2487 = vmatpush1.bf16.msra.mxu0 %v2430
    %2488 = vmatprep.subr.bf16.mxu0 %v2435
    %2489 = vmatpush1.bf16.msra.mxu0 %v2434
    %2490 = vmatprep.subr.bf16.mxu0 %v2439
    %2491 = vmatpush1.bf16.msra.mxu0 %v2438
    %2492 = vmatprep.subr.bf16.mxu0 %v2443
    %2493 = vmatpush1.bf16.msra.mxu0 %v2442
    %2494 = vmatprep.subr.bf16.mxu0 0
    %2495 = vmatpush1.bf16.msra.mxu0 0
    %2496 = vmatprep.subr.bf16.mxu0 0
    %2497 = vmatpush1.bf16.msra.mxu0 0
    %2498 = vmatprep.subr.bf16.mxu0 0
    %2499 = vmatpush1.bf16.msra.mxu0 0
    %2500 = vmatprep.subr.bf16.mxu0 0
    %2501 = vmatpush1.bf16.msra.mxu0 0
    %2502 = vmatprep.subr.bf16.mxu0 0
    %2503 = vmatpush1.bf16.msra.mxu0 0
    %2504 = vmatprep.subr.bf16.mxu0 0
    %2505 = vmatpush1.bf16.msra.mxu0 0
    %2506 = vmatprep.subr.bf16.mxu0 0
    %2507 = vmatpush1.bf16.msra.mxu0 0
    %2508 = vmatprep.subr.bf16.mxu0 0
    %2509 = vmatpush1.bf16.msra.mxu0 0
    %2510 = vmatprep.mubr.bf16.mxu0 0
    %2511 = vmatmul.mubr.bf16.gmra.mrb[0].mxu0 %v2296
    %v2512 = vpop.f32.mrb[0].mxu0
    %v2513 = vadd.f32 %v2301, %v2512
    %v2514 = vpop.f32.mrb[0].mxu0
    %v2515 = vadd.f32 %v2305, %v2514
    %v2516 = vpop.f32.mrb[0].mxu0
    %v2517 = vpop.f32.mrb[0].mxu0
    %2518 = vdwg.mxu0
    %2519 = vmatprep.subr.bf16.mxu0 %v2417
    %2520 = vmatpush1.bf16.msra.mxu0 %v2416
    %2521 = vmatprep.subr.bf16.mxu0 %v2421
    %2522 = vmatpush1.bf16.msra.mxu0 %v2420
    %2523 = vmatprep.subr.bf16.mxu0 %v2425
    %2524 = vmatpush1.bf16.msra.mxu0 %v2424
    %2525 = vmatprep.subr.bf16.mxu0 %v2429
    %2526 = vmatpush1.bf16.msra.mxu0 %v2428
    %2527 = vmatprep.subr.bf16.mxu0 %v2433
    %2528 = vmatpush1.bf16.msra.mxu0 %v2432
    %2529 = vmatprep.subr.bf16.mxu0 %v2437
    %2530 = vmatpush1.bf16.msra.mxu0 %v2436
    %2531 = vmatprep.subr.bf16.mxu0 %v2441
    %2532 = vmatpush1.bf16.msra.mxu0 %v2440
    %2533 = vmatprep.subr.bf16.mxu0 %v2445
    %2534 = vmatpush1.bf16.msra.mxu0 %v2444
    %2535 = vmatprep.subr.bf16.mxu0 0
    %2536 = vmatpush1.bf16.msra.mxu0 0
    %2537 = vmatprep.subr.bf16.mxu0 0
    %2538 = vmatpush1.bf16.msra.mxu0 0
    %2539 = vmatprep.subr.bf16.mxu0 0
    %2540 = vmatpush1.bf16.msra.mxu0 0
    %2541 = vmatprep.subr.bf16.mxu0 0
    %2542 = vmatpush1.bf16.msra.mxu0 0
    %2543 = vmatprep.subr.bf16.mxu0 0
    %2544 = vmatpush1.bf16.msra.mxu0 0
    %2545 = vmatprep.subr.bf16.mxu0 0
    %2546 = vmatpush1.bf16.msra.mxu0 0
    %2547 = vmatprep.subr.bf16.mxu0 0
    %2548 = vmatpush1.bf16.msra.mxu0 0
    %2549 = vmatprep.subr.bf16.mxu0 0
    %2550 = vmatpush1.bf16.msra.mxu0 0
    %2551 = vmatprep.mubr.bf16.mxu0 0
    %2552 = vmatmul.mubr.bf16.gmra.mrb[0].mxu0 %v2296
    %v2553 = vpop.f32.mrb[0].mxu0
    %v2554 = vadd.f32 %v2309, %v2553
    %v2555 = vpop.f32.mrb[0].mxu0
    %v2556 = vadd.f32 %v2313, %v2555
    %v2557 = vpop.f32.mrb[0].mxu0
    %v2558 = vpop.f32.mrb[0].mxu0
    %2559 = vdwg.mxu0
    %v2560 = vmax.f32 %v2513, 0.0
    %v2561 = vmax.f32 %v2515, 0.0
    %v2562 = vmax.f32 %v2554, 0.0
    %v2563 = vmax.f32 %v2556, 0.0
    %v2564 = vpack.c.bf16 %v2560, %v2560
    %v2565 = vpack.c.bf16 %v2561, %v2561
    %v2566 = vpack.c.bf16 %v2562, %v2562
    %v2567 = vpack.c.bf16 %v2563, %v2563
    %v2569 = vlaneseq
    %v2570 = vshrl.u32 %v2569, 7
    %v2571 = vsub.s32 0, %v2570
    %v2572 = vrot.slane %v61, %v2571
    %v2573 = vlaneseq
    %v2574 = vshrl.u32 %v2573, 7
    %v2575 = vsub.s32 1, %v2574
    %v2576 = vrot.slane %v61, %v2575
    %v2643 = vunpack.c.l.b16 %v337
    %v2644 = vunpack.c.h.b16 %v337
    %v2645 = vunpack.c.l.b16 %v338
    %v2646 = vunpack.c.h.b16 %v338
    %v2647 = vunpack.c.l.b16 %v339
    %v2648 = vunpack.c.h.b16 %v339
    %v2649 = vunpack.c.l.b16 %v340
    %v2650 = vunpack.c.h.b16 %v340
    %v2651 = vunpack.c.l.b16 %v341
    %v2652 = vunpack.c.h.b16 %v341
    %v2653 = vunpack.c.l.b16 %v342
    %v2654 = vunpack.c.h.b16 %v342
    %v2655 = vunpack.c.l.b16 %v343
    %v2656 = vunpack.c.h.b16 %v343
    %v2657 = vunpack.c.l.b16 %v344
    %v2658 = vunpack.c.h.b16 %v344
    %v2659 = vunpack.c.l.b16 %v345
    %v2660 = vunpack.c.h.b16 %v345
    %v2661 = vunpack.c.l.b16 %v346
    %v2662 = vunpack.c.h.b16 %v346
    %v2663 = vunpack.c.l.b16 %v347
    %v2664 = vunpack.c.h.b16 %v347
    %v2665 = vunpack.c.l.b16 %v348
    %v2666 = vunpack.c.h.b16 %v348
    %v2667 = vunpack.c.l.b16 %v349
    %v2668 = vunpack.c.h.b16 %v349
    %v2669 = vunpack.c.l.b16 %v350
    %v2670 = vunpack.c.h.b16 %v350
    %v2671 = vunpack.c.l.b16 %v351
    %v2672 = vunpack.c.h.b16 %v351
    %v2673 = vunpack.c.l.b16 %v352
    %v2674 = vunpack.c.h.b16 %v352
    %v2675 = vunpack.c.l.b16 %v353
    %v2676 = vunpack.c.h.b16 %v353
    %v2677 = vunpack.c.l.b16 %v354
    %v2678 = vunpack.c.h.b16 %v354
    %v2679 = vunpack.c.l.b16 %v355
    %v2680 = vunpack.c.h.b16 %v355
    %v2681 = vunpack.c.l.b16 %v356
    %v2682 = vunpack.c.h.b16 %v356
    %v2683 = vunpack.c.l.b16 %v357
    %v2684 = vunpack.c.h.b16 %v357
    %v2685 = vunpack.c.l.b16 %v358
    %v2686 = vunpack.c.h.b16 %v358
    %v2687 = vunpack.c.l.b16 %v359
    %v2688 = vunpack.c.h.b16 %v359
    %v2689 = vunpack.c.l.b16 %v360
    %v2690 = vunpack.c.h.b16 %v360
    %v2691 = vunpack.c.l.b16 %v361
    %v2692 = vunpack.c.h.b16 %v361
    %v2693 = vunpack.c.l.b16 %v362
    %v2694 = vunpack.c.h.b16 %v362
    %v2695 = vunpack.c.l.b16 %v363
    %v2696 = vunpack.c.h.b16 %v363
    %v2697 = vunpack.c.l.b16 %v364
    %v2698 = vunpack.c.h.b16 %v364
    %v2699 = vunpack.c.l.b16 %v365
    %v2700 = vunpack.c.h.b16 %v365
    %v2701 = vunpack.c.l.b16 %v366
    %v2702 = vunpack.c.h.b16 %v366
    %v2703 = vunpack.c.l.b16 %v367
    %v2704 = vunpack.c.h.b16 %v367
    %v2705 = vunpack.c.l.b16 %v368
    %v2706 = vunpack.c.h.b16 %v368
    %v2707 = vunpack.c.l.b16 %v369
    %v2708 = vunpack.c.h.b16 %v369
    %v2709 = vunpack.c.l.b16 %v370
    %v2710 = vunpack.c.h.b16 %v370
    %v2711 = vunpack.c.l.b16 %v371
    %v2712 = vunpack.c.h.b16 %v371
    %v2713 = vunpack.c.l.b16 %v372
    %v2714 = vunpack.c.h.b16 %v372
    %v2715 = vunpack.c.l.b16 %v373
    %v2716 = vunpack.c.h.b16 %v373
    %v2717 = vunpack.c.l.b16 %v374
    %v2718 = vunpack.c.h.b16 %v374
    %v2719 = vunpack.c.l.b16 %v375
    %v2720 = vunpack.c.h.b16 %v375
    %v2721 = vunpack.c.l.b16 %v376
    %v2722 = vunpack.c.h.b16 %v376
    %v2723 = vunpack.c.l.b16 %v377
    %v2724 = vunpack.c.h.b16 %v377
    %v2725 = vunpack.c.l.b16 %v378
    %v2726 = vunpack.c.h.b16 %v378
    %v2727 = vunpack.c.l.b16 %v379
    %v2728 = vunpack.c.h.b16 %v379
    %v2729 = vunpack.c.l.b16 %v380
    %v2730 = vunpack.c.h.b16 %v380
    %v2731 = vunpack.c.l.b16 %v381
    %v2732 = vunpack.c.h.b16 %v381
    %v2733 = vunpack.c.l.b16 %v382
    %v2734 = vunpack.c.h.b16 %v382
    %v2735 = vunpack.c.l.b16 %v383
    %v2736 = vunpack.c.h.b16 %v383
    %v2737 = vunpack.c.l.b16 %v384
    %v2738 = vunpack.c.h.b16 %v384
    %v2739 = vunpack.c.l.b16 %v385
    %v2740 = vunpack.c.h.b16 %v385
    %v2741 = vunpack.c.l.b16 %v386
    %v2742 = vunpack.c.h.b16 %v386
    %v2743 = vunpack.c.l.b16 %v387
    %v2744 = vunpack.c.h.b16 %v387
    %v2745 = vunpack.c.l.b16 %v388
    %v2746 = vunpack.c.h.b16 %v388
    %v2747 = vunpack.c.l.b16 %v389
    %v2748 = vunpack.c.h.b16 %v389
    %v2749 = vunpack.c.l.b16 %v390
    %v2750 = vunpack.c.h.b16 %v390
    %v2751 = vunpack.c.l.b16 %v391
    %v2752 = vunpack.c.h.b16 %v391
    %v2753 = vunpack.c.l.b16 %v392
    %v2754 = vunpack.c.h.b16 %v392
    %v2755 = vunpack.c.l.b16 %v393
    %v2756 = vunpack.c.h.b16 %v393
    %v2757 = vunpack.c.l.b16 %v394
    %v2758 = vunpack.c.h.b16 %v394
    %v2759 = vunpack.c.l.b16 %v395
    %v2760 = vunpack.c.h.b16 %v395
    %v2761 = vunpack.c.l.b16 %v396
    %v2762 = vunpack.c.h.b16 %v396
    %v2763 = vunpack.c.l.b16 %v397
    %v2764 = vunpack.c.h.b16 %v397
    %v2765 = vunpack.c.l.b16 %v398
    %v2766 = vunpack.c.h.b16 %v398
    %v2767 = vunpack.c.l.b16 %v399
    %v2768 = vunpack.c.h.b16 %v399
    %v2769 = vunpack.c.l.b16 %v400
    %v2770 = vunpack.c.h.b16 %v400
    %v2771 = vpack.c.b16 %v2645, %v2643
    %v2772 = vpack.c.b16 %v2646, %v2644
    %v2773 = vpack.c.b16 %v2649, %v2647
    %v2774 = vpack.c.b16 %v2650, %v2648
    %v2775 = vpack.c.b16 %v2653, %v2651
    %v2776 = vpack.c.b16 %v2654, %v2652
    %v2777 = vpack.c.b16 %v2657, %v2655
    %v2778 = vpack.c.b16 %v2658, %v2656
    %v2779 = vpack.c.b16 %v2661, %v2659
    %v2780 = vpack.c.b16 %v2662, %v2660
    %v2781 = vpack.c.b16 %v2665, %v2663
    %v2782 = vpack.c.b16 %v2666, %v2664
    %v2783 = vpack.c.b16 %v2669, %v2667
    %v2784 = vpack.c.b16 %v2670, %v2668
    %v2785 = vpack.c.b16 %v2673, %v2671
    %v2786 = vpack.c.b16 %v2674, %v2672
    %v2787 = vpack.c.b16 %v2677, %v2675
    %v2788 = vpack.c.b16 %v2678, %v2676
    %v2789 = vpack.c.b16 %v2681, %v2679
    %v2790 = vpack.c.b16 %v2682, %v2680
    %v2791 = vpack.c.b16 %v2685, %v2683
    %v2792 = vpack.c.b16 %v2686, %v2684
    %v2793 = vpack.c.b16 %v2689, %v2687
    %v2794 = vpack.c.b16 %v2690, %v2688
    %v2795 = vpack.c.b16 %v2693, %v2691
    %v2796 = vpack.c.b16 %v2694, %v2692
    %v2797 = vpack.c.b16 %v2697, %v2695
    %v2798 = vpack.c.b16 %v2698, %v2696
    %v2799 = vpack.c.b16 %v2701, %v2699
    %v2800 = vpack.c.b16 %v2702, %v2700
    %v2801 = vpack.c.b16 %v2705, %v2703
    %v2802 = vpack.c.b16 %v2706, %v2704
    %v2803 = vpack.c.b16 %v2709, %v2707
    %v2804 = vpack.c.b16 %v2710, %v2708
    %v2805 = vpack.c.b16 %v2713, %v2711
    %v2806 = vpack.c.b16 %v2714, %v2712
    %v2807 = vpack.c.b16 %v2717, %v2715
    %v2808 = vpack.c.b16 %v2718, %v2716
    %v2809 = vpack.c.b16 %v2721, %v2719
    %v2810 = vpack.c.b16 %v2722, %v2720
    %v2811 = vpack.c.b16 %v2725, %v2723
    %v2812 = vpack.c.b16 %v2726, %v2724
    %v2813 = vpack.c.b16 %v2729, %v2727
    %v2814 = vpack.c.b16 %v2730, %v2728
    %v2815 = vpack.c.b16 %v2733, %v2731
    %v2816 = vpack.c.b16 %v2734, %v2732
    %v2817 = vpack.c.b16 %v2737, %v2735
    %v2818 = vpack.c.b16 %v2738, %v2736
    %v2819 = vpack.c.b16 %v2741, %v2739
    %v2820 = vpack.c.b16 %v2742, %v2740
    %v2821 = vpack.c.b16 %v2745, %v2743
    %v2822 = vpack.c.b16 %v2746, %v2744
    %v2823 = vpack.c.b16 %v2749, %v2747
    %v2824 = vpack.c.b16 %v2750, %v2748
    %v2825 = vpack.c.b16 %v2753, %v2751
    %v2826 = vpack.c.b16 %v2754, %v2752
    %v2827 = vpack.c.b16 %v2757, %v2755
    %v2828 = vpack.c.b16 %v2758, %v2756
    %v2829 = vpack.c.b16 %v2761, %v2759
    %v2830 = vpack.c.b16 %v2762, %v2760
    %v2831 = vpack.c.b16 %v2765, %v2763
    %v2832 = vpack.c.b16 %v2766, %v2764
    %v2833 = vpack.c.b16 %v2769, %v2767
    %v2834 = vpack.c.b16 %v2770, %v2768
    %2899 = vmatprep.subr.bf16.mxu0 %v2772
    %2900 = vmatpush1.bf16.msra.mxu0 %v2771
    %2901 = vmatprep.subr.bf16.mxu0 %v2774
    %2902 = vmatpush1.bf16.msra.mxu0 %v2773
    %2903 = vmatprep.subr.bf16.mxu0 %v2776
    %2904 = vmatpush1.bf16.msra.mxu0 %v2775
    %2905 = vmatprep.subr.bf16.mxu0 %v2778
    %2906 = vmatpush1.bf16.msra.mxu0 %v2777
    %2907 = vmatprep.subr.bf16.mxu0 %v2780
    %2908 = vmatpush1.bf16.msra.mxu0 %v2779
    %2909 = vmatprep.subr.bf16.mxu0 %v2782
    %2910 = vmatpush1.bf16.msra.mxu0 %v2781
    %2911 = vmatprep.subr.bf16.mxu0 %v2784
    %2912 = vmatpush1.bf16.msra.mxu0 %v2783
    %2913 = vmatprep.subr.bf16.mxu0 %v2786
    %2914 = vmatpush1.bf16.msra.mxu0 %v2785
    %2915 = vmatprep.subr.bf16.mxu0 %v2788
    %2916 = vmatpush1.bf16.msra.mxu0 %v2787
    %2917 = vmatprep.subr.bf16.mxu0 %v2790
    %2918 = vmatpush1.bf16.msra.mxu0 %v2789
    %2919 = vmatprep.subr.bf16.mxu0 %v2792
    %2920 = vmatpush1.bf16.msra.mxu0 %v2791
    %2921 = vmatprep.subr.bf16.mxu0 %v2794
    %2922 = vmatpush1.bf16.msra.mxu0 %v2793
    %2923 = vmatprep.subr.bf16.mxu0 %v2796
    %2924 = vmatpush1.bf16.msra.mxu0 %v2795
    %2925 = vmatprep.subr.bf16.mxu0 %v2798
    %2926 = vmatpush1.bf16.msra.mxu0 %v2797
    %2927 = vmatprep.subr.bf16.mxu0 %v2800
    %2928 = vmatpush1.bf16.msra.mxu0 %v2799
    %2929 = vmatprep.subr.bf16.mxu0 %v2802
    %2930 = vmatpush1.bf16.msra.mxu0 %v2801
    %2931 = vmatprep.mubr.bf16.mxu0 %v2565
    %2932 = vmatmul.mubr.bf16.gmra.mrb[0].mxu0 %v2564
    %v2933 = vpop.f32.mrb[0].mxu0
    %v2934 = vadd.f32 %v2572, %v2933
    %v2935 = vpop.f32.mrb[0].mxu0
    %v2936 = vadd.f32 %v2576, %v2935
    %v2937 = vpop.f32.mrb[0].mxu0
    %v2938 = vpop.f32.mrb[0].mxu0
    %2939 = vdwg.mxu0
    %2940 = vmatprep.subr.bf16.mxu0 %v2804
    %2941 = vmatpush1.bf16.msra.mxu0 %v2803
    %2942 = vmatprep.subr.bf16.mxu0 %v2806
    %2943 = vmatpush1.bf16.msra.mxu0 %v2805
    %2944 = vmatprep.subr.bf16.mxu0 %v2808
    %2945 = vmatpush1.bf16.msra.mxu0 %v2807
    %2946 = vmatprep.subr.bf16.mxu0 %v2810
    %2947 = vmatpush1.bf16.msra.mxu0 %v2809
    %2948 = vmatprep.subr.bf16.mxu0 %v2812
    %2949 = vmatpush1.bf16.msra.mxu0 %v2811
    %2950 = vmatprep.subr.bf16.mxu0 %v2814
    %2951 = vmatpush1.bf16.msra.mxu0 %v2813
    %2952 = vmatprep.subr.bf16.mxu0 %v2816
    %2953 = vmatpush1.bf16.msra.mxu0 %v2815
    %2954 = vmatprep.subr.bf16.mxu0 %v2818
    %2955 = vmatpush1.bf16.msra.mxu0 %v2817
    %2956 = vmatprep.subr.bf16.mxu0 %v2820
    %2957 = vmatpush1.bf16.msra.mxu0 %v2819
    %2958 = vmatprep.subr.bf16.mxu0 %v2822
    %2959 = vmatpush1.bf16.msra.mxu0 %v2821
    %2960 = vmatprep.subr.bf16.mxu0 %v2824
    %2961 = vmatpush1.bf16.msra.mxu0 %v2823
    %2962 = vmatprep.subr.bf16.mxu0 %v2826
    %2963 = vmatpush1.bf16.msra.mxu0 %v2825
    %2964 = vmatprep.subr.bf16.mxu0 %v2828
    %2965 = vmatpush1.bf16.msra.mxu0 %v2827
    %2966 = vmatprep.subr.bf16.mxu0 %v2830
    %2967 = vmatpush1.bf16.msra.mxu0 %v2829
    %2968 = vmatprep.subr.bf16.mxu0 %v2832
    %2969 = vmatpush1.bf16.msra.mxu0 %v2831
    %2970 = vmatprep.subr.bf16.mxu0 %v2834
    %2971 = vmatpush1.bf16.msra.mxu0 %v2833
    %2972 = vmatprep.mubr.bf16.mxu0 %v2567
    %2973 = vmatmul.mubr.bf16.gmra.mrb[0].mxu0 %v2566
    %v2974 = vpop.f32.mrb[0].mxu0
    %v2975 = vadd.f32 %v2934, %v2974
    %v2976 = vpop.f32.mrb[0].mxu0
    %v2977 = vadd.f32 %v2936, %v2976
    %v2978 = vpop.f32.mrb[0].mxu0
    %v2979 = vpop.f32.mrb[0].mxu0
    %2980 = vdwg.mxu0
    %v2983 = vcombine.low %v2975, %v2977
    %v2985 = vunpack.c.l.s4 1983009808
    %v2986 = vunpack.c.0.s8 %v2985
    %v2987 = vlaneseq
    %v2988 = vshrl.u32 %v2987, 7
    %v2989 = vsub.s32 %v2986, %v2988
    %v2990 = vrot.slane %v2983, %v2989
    %2992 = vst [vmem:[#allocation7] sm:$0xf] %v2990
    // Predicated region
    $region30: #{stin_forward.1} parent=1 // pred_check
      _
    $region31: #{stin_forward.1} parent=1 // pred_check_branch
      %2994 = sbr.rel (0) target = $region33
    $region32: #{stin_forward.1} parent=1 // pred_region
      %s2996 = ssub.s32 64, 64
      %2997 = vsyncadd [#allocation4], %s2996
      %s2999 = sshll.u32 [#allocation7], 4
      %s3000 = int_to_ptr.vmem [resolvable:$true] %s2999
      %3002 = dma.vmem_to_hbm [thread:$0]  %s3000, 64, %s5, [#allocation4]
    $region33: #{stin_forward.1} parent=1 // pred_fallthru
      _
    // Predicated region
    $region34: #{stin_forward.1} parent=1 // pred_check
      _
    $region35: #{stin_forward.1} parent=1 // pred_check_branch
      %3004 = sbr.rel (0) target = $region37
    $region36: #{stin_forward.1} parent=1 // pred_region
      %3005 = dma.done [#allocation4], 64
    $region37: #{stin_forward.1} parent=1 // pred_fallthru
      _
    %3006 = vsyncpa [#allocation3], 1
    %3007 = vsyncpa [#allocation6], 1
    %3008 = vsyncpa [#allocation4], 1

</llo_original>
